<compile_context>
chip_gen: v6e
topology: v6e:2x2x1
jax: 0.10.0
libtpu: 0.0.40
codegen_flags: <defaults>
</compile_context>

<pallas_src>
import jax
import jax.numpy as jnp
from jax.experimental import pallas as pl
from jax.experimental.pallas import tpu as pltpu

IN_FEATURES = 28 * 28      # 784
HIDDEN = 128
OUT = 10
OUT_PADDED = 128           # lane-dense logits / output
NEG_INF = -1e30            # bias of padded logit columns -> exp() == 0


def mlp_kernel(x_ref, w1_ref, b1_ref, w2_ref, b2_ref, o_ref):
    # x_ref: (bm, 784) f32      w1_ref: (784, 128) bf16   b1_ref: (1, 128) f32
    # w2_ref: (128, 128) bf16   b2_ref: (1, 128) f32      o_ref: (bm, 128) bf16
    x = x_ref[...].astype(jnp.bfloat16)          # cast in-kernel (no extra HBM pass)

    # linear1 (bf16 MXU, f32 accumulate) + sigmoid (exp + reciprocal on EUP)
    h = jnp.dot(x, w1_ref[...], preferred_element_type=jnp.float32) + b1_ref[...]
    h = pl.reciprocal(1.0 + jnp.exp(-h), approx=False)

    # linear2 -> 128 lane-padded logits (padded cols: zero weights + -1e30 bias)
    logits = jnp.dot(h.astype(jnp.bfloat16), w2_ref[...],
                     preferred_element_type=jnp.float32) + b2_ref[...]

    # log_softmax along the feature axis; padded columns contribute exp(-huge)=0
    m = jnp.max(logits, axis=-1, keepdims=True)
    shifted = logits - m
    lse = jnp.log(jnp.sum(jnp.exp(shifted), axis=-1, keepdims=True))
    o_ref[...] = (shifted - lse).astype(o_ref.dtype)


def _round_up(n, m):
    return ((n + m - 1) // m) * m


def prepare_params(w1_t, b1, w2_t, b2):
    """Cast / pad params to the kernel layout.

    w1_t: (784, 128)  b1: (128,)  w2_t: (128, 10)  b2: (10,)   (all f32,
    weights stored transposed relative to PyTorch's (out, in)).
    """
    w1p = w1_t.astype(jnp.bfloat16)                                  # (784, 128)
    b1p = b1.reshape(1, HIDDEN).astype(jnp.float32)                  # (1, 128)
    w2p = jnp.zeros((HIDDEN, OUT_PADDED), jnp.bfloat16)
    w2p = w2p.at[:, :OUT].set(w2_t.astype(jnp.bfloat16))             # (128, 128)
    b2p = jnp.full((1, OUT_PADDED), NEG_INF, jnp.float32)
    b2p = b2p.at[0, :OUT].set(b2.astype(jnp.float32))                # (1, 128)
    return w1p, b1p, w2p, b2p


def mlp_forward(x, w1p, b1p, w2p, b2p, *, bm=1024):
    """x: (B, ...) -> log-probs (B, 10) f32. Flattens trailing dims (torch.flatten)."""
    B = x.shape[0]
    x_flat = x.reshape(B, -1)                    # free view; no extra HBM pass
    assert x_flat.shape[1] == IN_FEATURES

    # Batch tile: multiple of 256, never absurdly larger than needed, and capped
    # at ~half the batch so larger batches always give >= 2 grid steps (so the
    # "parallel" grid axis can shard across v7x's two TensorCores).
    bm = _round_up(max(256, bm), 256)
    bm = min(bm, _round_up(pl.cdiv(B, 2), 256))
    grid = pl.cdiv(B, bm)                        # partial tail block handled by Pallas

    out = pl.pallas_call(
        mlp_kernel,
        out_shape=jax.ShapeDtypeStruct((B, OUT_PADDED), jnp.bfloat16),
        grid_spec=pltpu.PrefetchScalarGridSpec(
            num_scalar_prefetch=0,
            grid=(grid,),
            in_specs=[
                # last dim 784 == full array dim -> legal, no wrapper padding
                pl.BlockSpec((bm, IN_FEATURES), lambda i: (i, 0)),
                pl.BlockSpec((IN_FEATURES, HIDDEN), lambda i: (0, 0)),
                pl.BlockSpec((1, HIDDEN), lambda i: (0, 0)),
                pl.BlockSpec((HIDDEN, OUT_PADDED), lambda i: (0, 0)),
                pl.BlockSpec((1, OUT_PADDED), lambda i: (0, 0)),
            ],
            out_specs=pl.BlockSpec((bm, OUT_PADDED), lambda i: (i, 0)),
        ),
        compiler_params=pltpu.CompilerParams(
            dimension_semantics=("parallel",)),
    )(x_flat, w1p, b1p, w2p, b2p)

    # Slice off the padded logit columns and cast back to f32 in one small pass.
    return out[:, :OUT].astype(jnp.float32)


def init_params(key):
    """Deterministic init mimicking PyTorch nn.Linear defaults U(-1/sqrt(fan_in), +)."""
    k1, k2, k3, k4 = jax.random.split(key, 4)
    bound1 = 1.0 / (IN_FEATURES ** 0.5)
    bound2 = 1.0 / (HIDDEN ** 0.5)
    w1_t = jax.random.uniform(k1, (IN_FEATURES, HIDDEN), jnp.float32, -bound1, bound1)
    b1 = jax.random.uniform(k2, (HIDDEN,), jnp.float32, -bound1, bound1)
    w2_t = jax.random.uniform(k3, (HIDDEN, OUT), jnp.float32, -bound2, bound2)
    b2 = jax.random.uniform(k4, (OUT,), jnp.float32, -bound2, bound2)
    return w1_t, b1, w2_t, b2


if __name__ == "__main__":
    key = jax.random.PRNGKey(0)
    k_x, k_p = jax.random.split(key)

    # B=300 exercises a 2-step grid (bm=256) plus a partial tail block (44 rows)
    # without any wrapper-side batch padding.
    B = 300
    x_nchw = jax.random.normal(k_x, (B, 1, 28, 28), jnp.float32)

    w1_t, b1, w2_t, b2 = init_params(k_p)
    w1p, b1p, w2p, b2p = prepare_params(w1_t, b1, w2_t, b2)

    out = mlp_forward(x_nchw, w1p, b1p, w2p, b2p)
    out = jax.block_until_ready(out)

    # Reference in full f32 (kernel streams bf16 weights / casts x to bf16 and
    # writes bf16 log-probs -> looser tolerance).
    x_flat = x_nchw.reshape(B, -1)
    h_ref = jax.nn.sigmoid(x_flat @ w1_t + b1)
    logits_ref = h_ref @ w2_t + b2
    ref = jax.nn.log_softmax(logits_ref, axis=1)

    assert out.shape == (B, OUT)
    max_err = float(jnp.max(jnp.abs(out - ref)))
    assert jnp.allclose(out, ref, atol=7.5e-2, rtol=7.5e-2), max_err
    # Rows must remain (approximately, given bf16 output) proper log-probabilities.
    assert jnp.allclose(jnp.sum(jnp.exp(out), axis=1), 1.0, atol=2e-2)

    print("KERNEL_OK")
</pallas_src>

<mosaic_0001>
module attributes {stable_mosaic.version = 11 : i64} {
  func.func @mlp_kernel(%arg0: i32, %arg1: memref<256x784xf32, #tpu.memory_space<vmem>>, %arg2: memref<784x128xbf16, #tpu.memory_space<vmem>>, %arg3: memref<1x128xf32, #tpu.memory_space<vmem>>, %arg4: memref<128x128xbf16, #tpu.memory_space<vmem>>, %arg5: memref<1x128xf32, #tpu.memory_space<vmem>>, %arg6: memref<256x128xbf16, #tpu.memory_space<vmem>>) attributes {dimension_semantics = [#tpu.dimension_semantics<parallel>], iteration_bounds = array<i64: 2>, scalar_prefetch = 0 : i64, scratch_operands = 0 : i64, tpu.core_type = #tpu.core_type<tc>, window_params = [{transform_indices = @transform_0, window_bounds = array<i64: 256, 784>}, {pipeline_mode = #tpu.pipeline_mode<synchronous>, transform_indices = @transform_1, window_bounds = array<i64: 784, 128>}, {pipeline_mode = #tpu.pipeline_mode<synchronous>, transform_indices = @transform_2, window_bounds = array<i64: 1, 128>}, {pipeline_mode = #tpu.pipeline_mode<synchronous>, transform_indices = @transform_3, window_bounds = array<i64: 128, 128>}, {pipeline_mode = #tpu.pipeline_mode<synchronous>, transform_indices = @transform_4, window_bounds = array<i64: 1, 128>}, {transform_indices = @transform_5, window_bounds = array<i64: 256, 128>}]} {
    %c0 = arith.constant 0 : index
    %c0_0 = arith.constant 0 : index
    %0 = vector.load %arg1[%c0, %c0_0] : memref<256x784xf32, #tpu.memory_space<vmem>>, vector<256x784xf32>
    %1 = arith.truncf %0 : vector<256x784xf32> to vector<256x784xbf16>
    %c0_1 = arith.constant 0 : index
    %c0_2 = arith.constant 0 : index
    %2 = vector.load %arg2[%c0_1, %c0_2] : memref<784x128xbf16, #tpu.memory_space<vmem>>, vector<784x128xbf16>
    %cst = arith.constant dense<0.000000e+00> : vector<256x128xf32>
    %3 = tpu.matmul %1, %2, %cst {dimension_numbers = #tpu.dot_dimension_numbers<[1], [0], [0], [1], [0, 0, 1, 1], [], []>} : vector<256x784xbf16>, vector<784x128xbf16>, vector<256x128xf32> -> vector<256x128xf32>
    %c0_3 = arith.constant 0 : index
    %c0_4 = arith.constant 0 : index
    %4 = vector.load %arg3[%c0_3, %c0_4] : memref<1x128xf32, #tpu.memory_space<vmem>>, vector<1x128xf32>
    %5 = vector.broadcast %4 : vector<1x128xf32> to vector<256x128xf32>
    %6 = arith.addf %3, %5 : vector<256x128xf32>
    %cst_5 = arith.constant 0.000000e+00 : f32
    %7 = vector.broadcast %cst_5 : f32 to vector<256x128xf32>
    %8 = arith.subf %7, %6 : vector<256x128xf32>
    %9 = math.exp %8 : vector<256x128xf32>
    %cst_6 = arith.constant 1.000000e+00 : f32
    %10 = vector.broadcast %cst_6 : f32 to vector<256x128xf32>
    %11 = arith.addf %10, %9 : vector<256x128xf32>
    %12 = tpu.reciprocal %11 : vector<256x128xf32> -> vector<256x128xf32>
    %13 = arith.truncf %12 : vector<256x128xf32> to vector<256x128xbf16>
    %c0_7 = arith.constant 0 : index
    %c0_8 = arith.constant 0 : index
    %14 = vector.load %arg4[%c0_7, %c0_8] : memref<128x128xbf16, #tpu.memory_space<vmem>>, vector<128x128xbf16>
    %cst_9 = arith.constant dense<0.000000e+00> : vector<256x128xf32>
    %15 = tpu.matmul %13, %14, %cst_9 {dimension_numbers = #tpu.dot_dimension_numbers<[1], [0], [0], [1], [0, 0, 1, 1], [], []>} : vector<256x128xbf16>, vector<128x128xbf16>, vector<256x128xf32> -> vector<256x128xf32>
    %c0_10 = arith.constant 0 : index
    %c0_11 = arith.constant 0 : index
    %16 = vector.load %arg5[%c0_10, %c0_11] : memref<1x128xf32, #tpu.memory_space<vmem>>, vector<1x128xf32>
    %17 = vector.broadcast %16 : vector<1x128xf32> to vector<256x128xf32>
    %18 = arith.addf %15, %17 : vector<256x128xf32>
    %cst_12 = arith.constant dense<0xFF800000> : vector<256xf32>
    %19 = vector.multi_reduction <maximumf>, %18, %cst_12 [1] : vector<256x128xf32> to vector<256xf32>
    %20 = vector.shape_cast %19 : vector<256xf32> to vector<256x1xf32>
    %21 = vector.broadcast %20 : vector<256x1xf32> to vector<256x128xf32>
    %22 = arith.subf %18, %21 : vector<256x128xf32>
    %23 = math.exp %22 : vector<256x128xf32>
    %cst_13 = arith.constant dense<0.000000e+00> : vector<256xf32>
    %24 = vector.multi_reduction <add>, %23, %cst_13 [1] : vector<256x128xf32> to vector<256xf32>
    %25 = vector.shape_cast %24 : vector<256xf32> to vector<256x1xf32>
    %26 = math.log %25 : vector<256x1xf32>
    %27 = vector.broadcast %26 : vector<256x1xf32> to vector<256x128xf32>
    %28 = arith.subf %22, %27 : vector<256x128xf32>
    %29 = arith.truncf %28 : vector<256x128xf32> to vector<256x128xbf16>
    %c0_14 = arith.constant 0 : index
    %c0_15 = arith.constant 0 : index
    %30 = vector.load %arg6[%c0_14, %c0_15] : memref<256x128xbf16, #tpu.memory_space<vmem>>, vector<256x128xbf16>
    tpu.vector_store %arg6[%c0_14, %c0_15], %29 {strides = array<i32>} : memref<256x128xbf16, #tpu.memory_space<vmem>>, vector<256x128xbf16>,
    return
  }
  func.func @transform_0(%arg0: i32) -> (i32, i32) {
    %c0_i32 = arith.constant 0 : i32
    %c0_i32_0 = arith.constant 0 : i32
    return %arg0, %c0_i32 : i32, i32
  }
  func.func @transform_1(%arg0: i32) -> (i32, i32) {
    %c0_i32 = arith.constant 0 : i32
    %c0_i32_0 = arith.constant 0 : i32
    %c0_i32_1 = arith.constant 0 : i32
    return %c0_i32, %c0_i32_0 : i32, i32
  }
  func.func @transform_2(%arg0: i32) -> (i32, i32) {
    %c0_i32 = arith.constant 0 : i32
    %c0_i32_0 = arith.constant 0 : i32
    %c0_i32_1 = arith.constant 0 : i32
    return %c0_i32, %c0_i32_0 : i32, i32
  }
  func.func @transform_3(%arg0: i32) -> (i32, i32) {
    %c0_i32 = arith.constant 0 : i32
    %c0_i32_0 = arith.constant 0 : i32
    %c0_i32_1 = arith.constant 0 : i32
    return %c0_i32, %c0_i32_0 : i32, i32
  }
  func.func @transform_4(%arg0: i32) -> (i32, i32) {
    %c0_i32 = arith.constant 0 : i32
    %c0_i32_0 = arith.constant 0 : i32
    %c0_i32_1 = arith.constant 0 : i32
    return %c0_i32, %c0_i32_0 : i32, i32
  }
  func.func @transform_5(%arg0: i32) -> (i32, i32) {
    %c0_i32 = arith.constant 0 : i32
    %c0_i32_0 = arith.constant 0 : i32
    return %arg0, %c0_i32 : i32, i32
  }
}

</mosaic_0001>

<llo_original>
// kernel: tpu_custom_call.1
$region0: #{tpu_custom_call.1}
  #allocation0 [shape = 'u32[]', space=smem, size = 0x4, offset = 0x4, fixed_abs, tag = 'smem constant byte address 0x4 - core index']
  #allocation1 [shape = 'u32[144,128]{1,0:T(1,128)}', space=vmem, size = 0x12000, scoped, tag = 'internal scratch']
  %s0 = inlined_call_operand.hbm [shape: f32[300,784], index: 0, kind: input, shape index: {}]
  %s1 = inlined_call_operand.hbm [shape: bf16[784,128], index: 1, kind: input, shape index: {}]
  %s2 = inlined_call_operand.hbm [shape: f32[1,128], index: 2, kind: input, shape index: {}]
  %s3 = inlined_call_operand.hbm [shape: bf16[128,128], index: 3, kind: input, shape index: {}]
  %s4 = inlined_call_operand.hbm [shape: f32[1,128], index: 4, kind: input, shape index: {}]
  %s5 = inlined_call_operand.hbm [shape: bf16[300,128], index: 5, kind: output, shape index: {}]
  %s6 = sld [smem:[#allocation0]]
  $region73: #{tpu_custom_call.1} parent=0
    _
  %s8 = ssub.s32 1, %s6
  %s9 = scalar_select 0, %s8, %s6
  $region1: #{tpu_custom_call.1} parent=0
    #allocation2 [shape = 'u8[1835008]{0}', space=vmem, size = 0x1c0000, scoped, tag = 'input window, operand 0']
    #allocation3 [shape = 's32[2]{0}', space=sflag, size = 0x8, scoped, tag = 'scoped memory for tpu_custom_call.1']
    #allocation4 [shape = 's32[2]{0}', space=sflag, size = 0x8, scoped, tag = 'scoped memory for tpu_custom_call.1']
    #allocation5 [shape = 'u8[200704]{0}', space=vmem, size = 0x31000, scoped, tag = 'input window, operand 1, single buffered']
    #allocation6 [shape = 's32[1]{0}', space=sflag, size = 0x4, scoped, tag = 'scoped memory for tpu_custom_call.1']
    #allocation7 [shape = 'u8[512]{0}', space=vmem, size = 0x400, scoped, tag = 'input window, operand 2, single buffered']
    #allocation8 [shape = 'u8[32768]{0}', space=vmem, size = 0x8000, scoped, tag = 'input window, operand 3, single buffered']
    #allocation9 [shape = 's32[1]{0}', space=sflag, size = 0x4, scoped, tag = 'scoped memory for tpu_custom_call.1']
    #allocation10 [shape = 'u8[512]{0}', space=vmem, size = 0x400, scoped, tag = 'input window, operand 4, single buffered']
    #allocation11 [shape = 'u8[131072]{0}', space=vmem, size = 0x20000, scoped, tag = 'output window, operand 0']
    %10 = vsyncpa [#allocation3], 0
    %s11 = scalar_lea.sflag [#allocation3], 1
    %12 = vsyncpa %s11, 0
    %13 = vsyncpa [#allocation6], 0
    %14 = vsyncpa [#allocation9], 0
    %15 = vsyncpa [#allocation4], 0
    %s16 = scalar_lea.sflag [#allocation4], 1
    %17 = vsyncpa %s16, 0
    loop: start=0, step=1, limit=4
    $region2: #{tpu_custom_call.1} parent=1 // loop_pre_header
      _
    $region3: #{tpu_custom_call.1} parent=1 // loop_header
      %s19 = sphi 0, %s23
      %p20 = scmp.ge.s32.totalorder %s19, 4
      %s29 = sphi 0, %s31
      %s32 = sphi 0, %s29
      %s33 = sphi 0, %s32
      %s49 = sphi 0, %s33
      %s53 = sphi 0, %s53
      %s55 = sphi 0, %s53
      %s56 = sphi 0, %s55
      %s70 = sphi 0, %s56
      %s74 = sphi 0, %s74
      %s76 = sphi 0, %s74
      %s77 = sphi 0, %s76
      %s91 = sphi 0, %s77
      %s95 = sphi 0, %s95
      %s97 = sphi 0, %s95
      %s98 = sphi 0, %s97
      %s112 = sphi 0, %s98
      %s116 = sphi 0, %s116
      %s118 = sphi 0, %s116
      %s119 = sphi 0, %s118
      %s133 = sphi 0, %s119
      %s139 = sphi 0, %s141
      %s142 = sphi 0, %s139
      %s143 = sphi 0, %s142
      %s159 = sphi 0, %s143
    $region4: #{tpu_custom_call.1} parent=1 // loop_header_branch
      %22 = sbr.rel (%p20) target = $region8
    $region5: #{tpu_custom_call.1} parent=1 // loop_body
      %s24 = ssub.s32 %s19, 1
      %s25 = ssub.s32 %s19, 2
      %s26 = sadd.s32 %s19, 1
      %s27 = ssub.s32 %s19, %s26
      %p28 = scmp.eq.s32.totalorder %s27, 0
      %s30 = sadd.s32 %s29, 1
      %s31 = scalar_select %p28, %s29, %s30
      %p34 = pneg %p28
      %p35 = scmp.eq.s32.totalorder %s19, 1
      %p36 = por %p34, %p35
      %p37 = scmp.ne.s32.totalorder %s29, %s32
      %p38 = scmp.eq.s32.totalorder %s19, 0
      %p39 = por %p37, %p38
      %p40 = scmp.ne.s32.totalorder %s29, %s32
      %p41 = scmp.eq.s32.totalorder %s24, 1
      %p42 = por %p40, %p41
      %p43 = scmp.ne.s32.totalorder %s32, %s33
      %p44 = scmp.eq.s32.totalorder %s24, 0
      %p45 = por %p43, %p44
      %p46 = scmp.ne.s32.totalorder %s32, %s33
      %p47 = scmp.eq.s32.totalorder %s25, 1
      %p48 = por %p46, %p47
      %p50 = scmp.ne.s32.totalorder %s33, %s49
      %p51 = scmp.eq.s32.totalorder %s25, 0
      %p52 = por %p50, %p51
      %s54 = sadd.s32 %s53, 1
      %p57 = scmp.eq.s32.totalorder %s19, 1
      %p58 = scmp.ne.s32.totalorder %s53, %s55
      %p59 = scmp.eq.s32.totalorder %s19, 0
      %p60 = por %p58, %p59
      %p61 = scmp.ne.s32.totalorder %s53, %s55
      %p62 = scmp.eq.s32.totalorder %s24, 1
      %p63 = por %p61, %p62
      %p64 = scmp.ne.s32.totalorder %s55, %s56
      %p65 = scmp.eq.s32.totalorder %s24, 0
      %p66 = por %p64, %p65
      %p67 = scmp.ne.s32.totalorder %s55, %s56
      %p68 = scmp.eq.s32.totalorder %s25, 1
      %p69 = por %p67, %p68
      %p71 = scmp.ne.s32.totalorder %s56, %s70
      %p72 = scmp.eq.s32.totalorder %s25, 0
      %p73 = por %p71, %p72
      %s75 = sadd.s32 %s74, 1
      %p78 = scmp.eq.s32.totalorder %s19, 1
      %p79 = scmp.ne.s32.totalorder %s74, %s76
      %p80 = scmp.eq.s32.totalorder %s19, 0
      %p81 = por %p79, %p80
      %p82 = scmp.ne.s32.totalorder %s74, %s76
      %p83 = scmp.eq.s32.totalorder %s24, 1
      %p84 = por %p82, %p83
      %p85 = scmp.ne.s32.totalorder %s76, %s77
      %p86 = scmp.eq.s32.totalorder %s24, 0
      %p87 = por %p85, %p86
      %p88 = scmp.ne.s32.totalorder %s76, %s77
      %p89 = scmp.eq.s32.totalorder %s25, 1
      %p90 = por %p88, %p89
      %p92 = scmp.ne.s32.totalorder %s77, %s91
      %p93 = scmp.eq.s32.totalorder %s25, 0
      %p94 = por %p92, %p93
      %s96 = sadd.s32 %s95, 1
      %p99 = scmp.eq.s32.totalorder %s19, 1
      %p100 = scmp.ne.s32.totalorder %s95, %s97
      %p101 = scmp.eq.s32.totalorder %s19, 0
      %p102 = por %p100, %p101
      %p103 = scmp.ne.s32.totalorder %s95, %s97
      %p104 = scmp.eq.s32.totalorder %s24, 1
      %p105 = por %p103, %p104
      %p106 = scmp.ne.s32.totalorder %s97, %s98
      %p107 = scmp.eq.s32.totalorder %s24, 0
      %p108 = por %p106, %p107
      %p109 = scmp.ne.s32.totalorder %s97, %s98
      %p110 = scmp.eq.s32.totalorder %s25, 1
      %p111 = por %p109, %p110
      %p113 = scmp.ne.s32.totalorder %s98, %s112
      %p114 = scmp.eq.s32.totalorder %s25, 0
      %p115 = por %p113, %p114
      %s117 = sadd.s32 %s116, 1
      %p120 = scmp.eq.s32.totalorder %s19, 1
      %p121 = scmp.ne.s32.totalorder %s116, %s118
      %p122 = scmp.eq.s32.totalorder %s19, 0
      %p123 = por %p121, %p122
      %p124 = scmp.ne.s32.totalorder %s116, %s118
      %p125 = scmp.eq.s32.totalorder %s24, 1
      %p126 = por %p124, %p125
      %p127 = scmp.ne.s32.totalorder %s118, %s119
      %p128 = scmp.eq.s32.totalorder %s24, 0
      %p129 = por %p127, %p128
      %p130 = scmp.ne.s32.totalorder %s118, %s119
      %p131 = scmp.eq.s32.totalorder %s25, 1
      %p132 = por %p130, %p131
      %p134 = scmp.ne.s32.totalorder %s119, %s133
      %p135 = scmp.eq.s32.totalorder %s25, 0
      %p136 = por %p134, %p135
      %s137 = ssub.s32 %s19, %s26
      %p138 = scmp.eq.s32.totalorder %s137, 0
      %s140 = sadd.s32 %s139, 1
      %s141 = scalar_select %p138, %s139, %s140
      %p144 = pneg %p138
      %p145 = scmp.eq.s32.totalorder %s19, 1
      %p146 = por %p144, %p145
      %p147 = scmp.ne.s32.totalorder %s139, %s142
      %p148 = scmp.eq.s32.totalorder %s19, 0
      %p149 = por %p147, %p148
      %p150 = scmp.ne.s32.totalorder %s139, %s142
      %p151 = scmp.eq.s32.totalorder %s24, 1
      %p152 = por %p150, %p151
      %p153 = scmp.ne.s32.totalorder %s142, %s143
      %p154 = scmp.eq.s32.totalorder %s24, 0
      %p155 = por %p153, %p154
      %p156 = scmp.ne.s32.totalorder %s142, %s143
      %p157 = scmp.eq.s32.totalorder %s25, 1
      %p158 = por %p156, %p157
      %p160 = scmp.ne.s32.totalorder %s143, %s159
      %p161 = scmp.eq.s32.totalorder %s25, 0
      %p162 = por %p160, %p161
      %p163 = scmp.le.s32.totalorder 1, %s19
      %p164 = scmp.lt.s32.totalorder %s19, 3
      %p165 = pnand %p163, %p164
      %p166 = pneg %p165
      // Predicated region
      $region9: #{tpu_custom_call.1} parent=5 // pred_check
        _
      $region10: #{tpu_custom_call.1} parent=5 // pred_check_branch
        %168 = sbr.rel (%p165) target = $region12
      $region11: #{tpu_custom_call.1} parent=5 // pred_region
        %s169 = ssub.s32 %s19, 1
        // Predicated region
        $region13: #{tpu_custom_call.1} parent=11 // pred_check
          %p170 = pneg %p66
        $region14: #{tpu_custom_call.1} parent=11 // pred_check_branch
          %172 = sbr.rel (%p170) target = $region16
        $region15: #{tpu_custom_call.1} parent=11 // pred_region
          %s174 = ssub.s32 6272, 6272
          %175 = vsyncadd [#allocation6], %s174
          %s176 = sshll.u32 [#allocation5], 4
          %s177 = int_to_ptr.vmem [resolvable:$true] %s176
          %182 = dma.hbm_to_vmem [thread:$0]  %s1, 6272, %s177, [#allocation6], 64, 64, 4
        $region16: #{tpu_custom_call.1} parent=11 // pred_fallthru
          _
        // Predicated region
        $region17: #{tpu_custom_call.1} parent=11 // pred_check
          %p183 = pneg %p87
        $region18: #{tpu_custom_call.1} parent=11 // pred_check_branch
          %185 = sbr.rel (%p183) target = $region20
        $region19: #{tpu_custom_call.1} parent=11 // pred_region
          %s187 = ssub.s32 16, 16
          %188 = vsyncadd [#allocation6], %s187
          %s190 = sshll.u32 [#allocation7], 4
          %s191 = int_to_ptr.vmem [resolvable:$true] %s190
          %193 = dma.hbm_to_vmem [thread:$0]  %s2, 16, %s191, [#allocation6]
        $region20: #{tpu_custom_call.1} parent=11 // pred_fallthru
          _
        // Predicated region
        $region21: #{tpu_custom_call.1} parent=11 // pred_check
          %p194 = pneg %p108
        $region22: #{tpu_custom_call.1} parent=11 // pred_check_branch
          %196 = sbr.rel (%p194) target = $region24
        $region23: #{tpu_custom_call.1} parent=11 // pred_region
          %s198 = ssub.s32 1024, 1024
          %199 = vsyncadd [#allocation9], %s198
          %s200 = sshll.u32 [#allocation8], 4
          %s201 = int_to_ptr.vmem [resolvable:$true] %s200
          %206 = dma.hbm_to_vmem [thread:$0]  %s3, 1024, %s201, [#allocation9], 64, 64, 4
        $region24: #{tpu_custom_call.1} parent=11 // pred_fallthru
          _
        // Predicated region
        $region25: #{tpu_custom_call.1} parent=11 // pred_check
          %p207 = pneg %p129
        $region26: #{tpu_custom_call.1} parent=11 // pred_check_branch
          %209 = sbr.rel (%p207) target = $region28
        $region27: #{tpu_custom_call.1} parent=11 // pred_region
          %s211 = ssub.s32 16, 16
          %212 = vsyncadd [#allocation9], %s211
          %s214 = sshll.u32 [#allocation10], 4
          %s215 = int_to_ptr.vmem [resolvable:$true] %s214
          %217 = dma.hbm_to_vmem [thread:$0]  %s4, 16, %s215, [#allocation9]
        $region28: #{tpu_custom_call.1} parent=11 // pred_fallthru
          _
      $region12: #{tpu_custom_call.1} parent=5 // pred_fallthru
        _
      %p218 = scmp.lt.s32.totalorder %s19, 2
      // Predicated region
      $region29: #{tpu_custom_call.1} parent=5 // pred_check
        %p219 = pneg %p218
      $region30: #{tpu_custom_call.1} parent=5 // pred_check_branch
        %221 = sbr.rel (%p219) target = $region32
      $region31: #{tpu_custom_call.1} parent=5 // pred_region
        // Predicated region
        $region33: #{tpu_custom_call.1} parent=31 // pred_check
          %p222 = pneg %p39
        $region34: #{tpu_custom_call.1} parent=31 // pred_check_branch
          %224 = sbr.rel (%p222) target = $region36
        $region35: #{tpu_custom_call.1} parent=31 // pred_region
          %s225 = sand.u32 %s29, 1
          %s226 = scalar_lea.sflag [#allocation3], %s225
          %s227 = sand.u32 %s29, 1
          %s228 = smul.addr %s227, 1792
          %s229 = scalar_lea.vmem [#allocation2], %s228
          %s230 = smul.u32 32, %s19
          %s231 = ssub.s32 38, %s230
          %p232 = scmp.lt.s32.totalorder %s231, 32
          %s233 = scalar_select %p232, %s231, 32
          %s234 = smul.u32 128, %s233
          %s235 = smul.u32 %s234, 7
          %s237 = ssub.s32 28672, %s235
          %238 = vsyncadd %s226, %s237
          %p239 = scmp.ne.s32.totalorder 0, %s235
          %s240 = smul.addr %s230, 7
          %s241 = smul.addr %s240, 128
          %s242 = scalar_lea.hbm %s0, %s241
          %s243 = smul.u32 56, %s233
          %s244 = sshll.u32 %s229, 4
          %s245 = int_to_ptr.vmem [resolvable:$true] %s244
          %s246 = sshll.u32 %s243, 4
          %250 = dma.hbm_to_vmem [thread:$0]  (%p239), %s242, %s246, %s245, %s226, 896, 896, 56
        $region36: #{tpu_custom_call.1} parent=31 // pred_fallthru
          _
      $region32: #{tpu_custom_call.1} parent=5 // pred_fallthru
        _
      %p251 = scmp.le.s32.totalorder 1, %s19
      %p252 = scmp.lt.s32.totalorder %s19, 3
      %p253 = pnand %p251, %p252
      %p254 = pneg %p253
      // Predicated region
      $region37: #{tpu_custom_call.1} parent=5 // pred_check
        _
      $region38: #{tpu_custom_call.1} parent=5 // pred_check_branch
        %256 = sbr.rel (%p253) target = $region40
      $region39: #{tpu_custom_call.1} parent=5 // pred_region
        %s257 = ssub.s32 %s19, 1
        %s258 = sand.u32 %s32, 1
        %s259 = scalar_lea.sflag [#allocation3], %s258
        %s260 = sand.u32 %s32, 1
        %s261 = smul.addr %s260, 1792
        %s262 = scalar_lea.vmem [#allocation2], %s261
        // Predicated region
        $region41: #{tpu_custom_call.1} parent=39 // pred_check
          %p263 = pneg %p45
        $region42: #{tpu_custom_call.1} parent=39 // pred_check_branch
          %265 = sbr.rel (%p263) target = $region44
        $region43: #{tpu_custom_call.1} parent=39 // pred_region
          %266 = dma.done %s259, 28672
        $region44: #{tpu_custom_call.1} parent=39 // pred_fallthru
          _
        // Predicated region
        $region45: #{tpu_custom_call.1} parent=39 // pred_check
          %p267 = pneg %p66
        $region46: #{tpu_custom_call.1} parent=39 // pred_check_branch
          %269 = sbr.rel (%p267) target = $region48
        $region47: #{tpu_custom_call.1} parent=39 // pred_region
          %270 = dma.done [#allocation6], 6272
        $region48: #{tpu_custom_call.1} parent=39 // pred_fallthru
          _
        // Predicated region
        $region49: #{tpu_custom_call.1} parent=39 // pred_check
          %p271 = pneg %p87
        $region50: #{tpu_custom_call.1} parent=39 // pred_check_branch
          %273 = sbr.rel (%p271) target = $region52
        $region51: #{tpu_custom_call.1} parent=39 // pred_region
          %274 = dma.done [#allocation6], 16
        $region52: #{tpu_custom_call.1} parent=39 // pred_fallthru
          _
        // Predicated region
        $region53: #{tpu_custom_call.1} parent=39 // pred_check
          %p275 = pneg %p108
        $region54: #{tpu_custom_call.1} parent=39 // pred_check_branch
          %277 = sbr.rel (%p275) target = $region56
        $region55: #{tpu_custom_call.1} parent=39 // pred_region
          %278 = dma.done [#allocation9], 1024
        $region56: #{tpu_custom_call.1} parent=39 // pred_fallthru
          _
        // Predicated region
        $region57: #{tpu_custom_call.1} parent=39 // pred_check
          %p279 = pneg %p129
        $region58: #{tpu_custom_call.1} parent=39 // pred_check_branch
          %281 = sbr.rel (%p279) target = $region60
        $region59: #{tpu_custom_call.1} parent=39 // pred_region
          %282 = dma.done [#allocation9], 16
        $region60: #{tpu_custom_call.1} parent=39 // pred_fallthru
          _
        %s283 = sand.u32 %s32, 1
        %s284 = scalar_lea.sflag [#allocation3], %s283
        %s285 = sand.u32 %s32, 1
        %s286 = smul.addr %s285, 1792
        %s287 = scalar_lea.vmem [#allocation2], %s286
        %p288 = pneg %p45
        %p289 = pneg %p42
        %p290 = pneg %p66
        %p291 = pneg %p63
        %p292 = pneg %p87
        %p293 = pneg %p84
        %p294 = pneg %p108
        %p295 = pneg %p105
        %p296 = pneg %p129
        %p297 = pneg %p126
        %p298 = pneg %p155
        %p299 = pneg %p152
        %s300 = sand.u32 %s142, 1
        %s301 = scalar_lea.sflag [#allocation4], %s300
        %s302 = sand.u32 %s142, 1
        %s303 = smul.addr %s302, 128
        %s304 = scalar_lea.vmem [#allocation11], %s303
        %s305 = smul.u32 32, %s24
        %s306 = ssub.s32 38, %s305
        %p307 = scmp.lt.s32.totalorder %s306, 32
        %s308 = scalar_select %p307, %s306, 32
        %s309 = smul.u32 128, %s308
        %s310 = smul.u32 %s309, 7
        %s311 = smul.u32 32, %s24
        %s312 = ssub.s32 38, %s311
        %p313 = scmp.lt.s32.totalorder %s312, 32
        %s314 = scalar_select %p313, %s312, 32
        %s315 = smul.u32 64, %s314
        %v317 = vld [vmem:[%s262] sm:$0xff]
        %v318 = vld [vmem:[%s262 + $0x8] sm:$0xff]
        %v319 = vld [vmem:[%s262 + $0x10] sm:$0xff]
        %v320 = vld [vmem:[%s262 + $0x18] sm:$0xff]
        %v321 = vld [vmem:[%s262 + $0x20] sm:$0xff]
        %v322 = vld [vmem:[%s262 + $0x28] sm:$0xff]
        %v323 = vld [vmem:[%s262 + $0x30] sm:$0xff]
        %v324 = vld [vmem:[%s262 + $0x38] sm:$0xff]
        %v325 = vld [vmem:[%s262 + $0x40] sm:$0xff]
        %v326 = vld [vmem:[%s262 + $0x48] sm:$0xff]
        %v327 = vld [vmem:[%s262 + $0x50] sm:$0xff]
        %v328 = vld [vmem:[%s262 + $0x58] sm:$0xff]
        %v329 = vld [vmem:[%s262 + $0x60] sm:$0xff]
        %v330 = vld [vmem:[%s262 + $0x68] sm:$0xff]
        %v331 = vld [vmem:[%s262 + $0x70] sm:$0xff]
        %v332 = vld [vmem:[%s262 + $0x78] sm:$0xff]
        %v333 = vld [vmem:[%s262 + $0x80] sm:$0xff]
        %v334 = vld [vmem:[%s262 + $0x88] sm:$0xff]
        %v335 = vld [vmem:[%s262 + $0x90] sm:$0xff]
        %v336 = vld [vmem:[%s262 + $0x98] sm:$0xff]
        %v337 = vld [vmem:[%s262 + $0xa0] sm:$0xff]
        %v338 = vld [vmem:[%s262 + $0xa8] sm:$0xff]
        %v339 = vld [vmem:[%s262 + $0xb0] sm:$0xff]
        %v340 = vld [vmem:[%s262 + $0xb8] sm:$0xff]
        %v341 = vld [vmem:[%s262 + $0xc0] sm:$0xff]
        %v342 = vld [vmem:[%s262 + $0xc8] sm:$0xff]
        %v343 = vld [vmem:[%s262 + $0xd0] sm:$0xff]
        %v344 = vld [vmem:[%s262 + $0xd8] sm:$0xff]
        %v345 = vld [vmem:[%s262 + $0xe0] sm:$0xff]
        %v346 = vld [vmem:[%s262 + $0xe8] sm:$0xff]
        %v347 = vld [vmem:[%s262 + $0xf0] sm:$0xff]
        %v348 = vld [vmem:[%s262 + $0xf8] sm:$0xff]
        %v349 = vld [vmem:[%s262 + $0x100] sm:$0xff]
        %v350 = vld [vmem:[%s262 + $0x108] sm:$0xff]
        %v351 = vld [vmem:[%s262 + $0x110] sm:$0xff]
        %v352 = vld [vmem:[%s262 + $0x118] sm:$0xff]
        %v353 = vld [vmem:[%s262 + $0x120] sm:$0xff]
        %v354 = vld [vmem:[%s262 + $0x128] sm:$0xff]
        %v355 = vld [vmem:[%s262 + $0x130] sm:$0xff]
        %v356 = vld [vmem:[%s262 + $0x138] sm:$0xff]
        %v357 = vld [vmem:[%s262 + $0x140] sm:$0xff]
        %v358 = vld [vmem:[%s262 + $0x148] sm:$0xff]
        %v359 = vld [vmem:[%s262 + $0x150] sm:$0xff]
        %v360 = vld [vmem:[%s262 + $0x158] sm:$0xff]
        %v361 = vld [vmem:[%s262 + $0x160] sm:$0xff]
        %v362 = vld [vmem:[%s262 + $0x168] sm:$0xff]
        %v363 = vld [vmem:[%s262 + $0x170] sm:$0xff]
        %v364 = vld [vmem:[%s262 + $0x178] sm:$0xff]
        %v365 = vld [vmem:[%s262 + $0x180] sm:$0xff]
        %v366 = vld [vmem:[%s262 + $0x188] sm:$0xff]
        %v367 = vld [vmem:[%s262 + $0x190] sm:$0xff]
        %v368 = vld [vmem:[%s262 + $0x198] sm:$0xff]
        %v369 = vld [vmem:[%s262 + $0x1a0] sm:$0xff]
        %v370 = vld [vmem:[%s262 + $0x1a8] sm:$0xff]
        %v371 = vld [vmem:[%s262 + $0x1b0] sm:$0xff]
        %v372 = vld [vmem:[%s262 + $0x1b8] sm:$0xff]
        %v373 = vld [vmem:[%s262 + $0x1c0] sm:$0xff]
        %v374 = vld [vmem:[%s262 + $0x1c8] sm:$0xff]
        %v375 = vld [vmem:[%s262 + $0x1d0] sm:$0xff]
        %v376 = vld [vmem:[%s262 + $0x1d8] sm:$0xff]
        %v377 = vld [vmem:[%s262 + $0x1e0] sm:$0xff]
        %v378 = vld [vmem:[%s262 + $0x1e8] sm:$0xff]
        %v379 = vld [vmem:[%s262 + $0x1f0] sm:$0xff]
        %v380 = vld [vmem:[%s262 + $0x1f8] sm:$0xff]
        %v381 = vld [vmem:[%s262 + $0x200] sm:$0xff]
        %v382 = vld [vmem:[%s262 + $0x208] sm:$0xff]
        %v383 = vld [vmem:[%s262 + $0x210] sm:$0xff]
        %v384 = vld [vmem:[%s262 + $0x218] sm:$0xff]
        %v385 = vld [vmem:[%s262 + $0x220] sm:$0xff]
        %v386 = vld [vmem:[%s262 + $0x228] sm:$0xff]
        %v387 = vld [vmem:[%s262 + $0x230] sm:$0xff]
        %v388 = vld [vmem:[%s262 + $0x238] sm:$0xff]
        %v389 = vld [vmem:[%s262 + $0x240] sm:$0xff]
        %v390 = vld [vmem:[%s262 + $0x248] sm:$0xff]
        %v391 = vld [vmem:[%s262 + $0x250] sm:$0xff]
        %v392 = vld [vmem:[%s262 + $0x258] sm:$0xff]
        %v393 = vld [vmem:[%s262 + $0x260] sm:$0xff]
        %v394 = vld [vmem:[%s262 + $0x268] sm:$0xff]
        %v395 = vld [vmem:[%s262 + $0x270] sm:$0xff]
        %v396 = vld [vmem:[%s262 + $0x278] sm:$0xff]
        %v397 = vld [vmem:[%s262 + $0x280] sm:$0xff]
        %v398 = vld [vmem:[%s262 + $0x288] sm:$0xff]
        %v399 = vld [vmem:[%s262 + $0x290] sm:$0xff]
        %v400 = vld [vmem:[%s262 + $0x298] sm:$0xff]
        %v401 = vld [vmem:[%s262 + $0x2a0] sm:$0xff]
        %v402 = vld [vmem:[%s262 + $0x2a8] sm:$0xff]
        %v403 = vld [vmem:[%s262 + $0x2b0] sm:$0xff]
        %v404 = vld [vmem:[%s262 + $0x2b8] sm:$0xff]
        %v405 = vld [vmem:[%s262 + $0x2c0] sm:$0xff]
        %v406 = vld [vmem:[%s262 + $0x2c8] sm:$0xff]
        %v407 = vld [vmem:[%s262 + $0x2d0] sm:$0xff]
        %v408 = vld [vmem:[%s262 + $0x2d8] sm:$0xff]
        %v409 = vld [vmem:[%s262 + $0x2e0] sm:$0xff]
        %v410 = vld [vmem:[%s262 + $0x2e8] sm:$0xff]
        %v411 = vld [vmem:[%s262 + $0x2f0] sm:$0xff]
        %v412 = vld [vmem:[%s262 + $0x2f8] sm:$0xff]
        %v413 = vld [vmem:[%s262 + $0x300] sm:$0xff]
        %v414 = vld [vmem:[%s262 + $0x308] sm:$0xff]
        %v415 = vld [vmem:[%s262 + $0x310] sm:$0xff]
        %v416 = vld [vmem:[%s262 + $0x318] sm:$0xff]
        %v417 = vld [vmem:[%s262 + $0x320] sm:$0xff]
        %v418 = vld [vmem:[%s262 + $0x328] sm:$0xff]
        %v419 = vld [vmem:[%s262 + $0x330] sm:$0xff]
        %v420 = vld [vmem:[%s262 + $0x338] sm:$0xff]
        %v421 = vld [vmem:[%s262 + $0x340] sm:$0xff]
        %v422 = vld [vmem:[%s262 + $0x348] sm:$0xff]
        %v423 = vld [vmem:[%s262 + $0x350] sm:$0xff]
        %v424 = vld [vmem:[%s262 + $0x358] sm:$0xff]
        %v425 = vld [vmem:[%s262 + $0x360] sm:$0xff]
        %v426 = vld [vmem:[%s262 + $0x368] sm:$0xff]
        %v427 = vld [vmem:[%s262 + $0x370] sm:$0xff]
        %v428 = vld [vmem:[%s262 + $0x378] sm:$0xff]
        %v429 = vld [vmem:[%s262 + $0x380] sm:$0xff]
        %v430 = vld [vmem:[%s262 + $0x388] sm:$0xff]
        %v431 = vld [vmem:[%s262 + $0x390] sm:$0xff]
        %v432 = vld [vmem:[%s262 + $0x398] sm:$0xff]
        %v433 = vld [vmem:[%s262 + $0x3a0] sm:$0xff]
        %v434 = vld [vmem:[%s262 + $0x3a8] sm:$0xff]
        %v435 = vld [vmem:[%s262 + $0x3b0] sm:$0xff]
        %v436 = vld [vmem:[%s262 + $0x3b8] sm:$0xff]
        %v437 = vld [vmem:[%s262 + $0x3c0] sm:$0xff]
        %v438 = vld [vmem:[%s262 + $0x3c8] sm:$0xff]
        %v439 = vld [vmem:[%s262 + $0x3d0] sm:$0xff]
        %v440 = vld [vmem:[%s262 + $0x3d8] sm:$0xff]
        %v441 = vld [vmem:[%s262 + $0x3e0] sm:$0xff]
        %v442 = vld [vmem:[%s262 + $0x3e8] sm:$0xff]
        %v443 = vld [vmem:[%s262 + $0x3f0] sm:$0xff]
        %v444 = vld [vmem:[%s262 + $0x3f8] sm:$0xff]
        %v445 = vld [vmem:[%s262 + $0x400] sm:$0xff]
        %v446 = vld [vmem:[%s262 + $0x408] sm:$0xff]
        %v447 = vld [vmem:[%s262 + $0x410] sm:$0xff]
        %v448 = vld [vmem:[%s262 + $0x418] sm:$0xff]
        %v449 = vld [vmem:[%s262 + $0x420] sm:$0xff]
        %v450 = vld [vmem:[%s262 + $0x428] sm:$0xff]
        %v451 = vld [vmem:[%s262 + $0x430] sm:$0xff]
        %v452 = vld [vmem:[%s262 + $0x438] sm:$0xff]
        %v453 = vld [vmem:[%s262 + $0x440] sm:$0xff]
        %v454 = vld [vmem:[%s262 + $0x448] sm:$0xff]
        %v455 = vld [vmem:[%s262 + $0x450] sm:$0xff]
        %v456 = vld [vmem:[%s262 + $0x458] sm:$0xff]
        %v457 = vld [vmem:[%s262 + $0x460] sm:$0xff]
        %v458 = vld [vmem:[%s262 + $0x468] sm:$0xff]
        %v459 = vld [vmem:[%s262 + $0x470] sm:$0xff]
        %v460 = vld [vmem:[%s262 + $0x478] sm:$0xff]
        %v461 = vld [vmem:[%s262 + $0x480] sm:$0xff]
        %v462 = vld [vmem:[%s262 + $0x488] sm:$0xff]
        %v463 = vld [vmem:[%s262 + $0x490] sm:$0xff]
        %v464 = vld [vmem:[%s262 + $0x498] sm:$0xff]
        %v465 = vld [vmem:[%s262 + $0x4a0] sm:$0xff]
        %v466 = vld [vmem:[%s262 + $0x4a8] sm:$0xff]
        %v467 = vld [vmem:[%s262 + $0x4b0] sm:$0xff]
        %v468 = vld [vmem:[%s262 + $0x4b8] sm:$0xff]
        %v469 = vld [vmem:[%s262 + $0x4c0] sm:$0xff]
        %v470 = vld [vmem:[%s262 + $0x4c8] sm:$0xff]
        %v471 = vld [vmem:[%s262 + $0x4d0] sm:$0xff]
        %v472 = vld [vmem:[%s262 + $0x4d8] sm:$0xff]
        %v473 = vld [vmem:[%s262 + $0x4e0] sm:$0xff]
        %v474 = vld [vmem:[%s262 + $0x4e8] sm:$0xff]
        %v475 = vld [vmem:[%s262 + $0x4f0] sm:$0xff]
        %v476 = vld [vmem:[%s262 + $0x4f8] sm:$0xff]
        %v477 = vld [vmem:[%s262 + $0x500] sm:$0xff]
        %v478 = vld [vmem:[%s262 + $0x508] sm:$0xff]
        %v479 = vld [vmem:[%s262 + $0x510] sm:$0xff]
        %v480 = vld [vmem:[%s262 + $0x518] sm:$0xff]
        %v481 = vld [vmem:[%s262 + $0x520] sm:$0xff]
        %v482 = vld [vmem:[%s262 + $0x528] sm:$0xff]
        %v483 = vld [vmem:[%s262 + $0x530] sm:$0xff]
        %v484 = vld [vmem:[%s262 + $0x538] sm:$0xff]
        %v485 = vld [vmem:[%s262 + $0x540] sm:$0xff]
        %v486 = vld [vmem:[%s262 + $0x548] sm:$0xff]
        %v487 = vld [vmem:[%s262 + $0x550] sm:$0xff]
        %v488 = vld [vmem:[%s262 + $0x558] sm:$0xff]
        %v489 = vld [vmem:[%s262 + $0x560] sm:$0xff]
        %v490 = vld [vmem:[%s262 + $0x568] sm:$0xff]
        %v491 = vld [vmem:[%s262 + $0x570] sm:$0xff]
        %v492 = vld [vmem:[%s262 + $0x578] sm:$0xff]
        %v493 = vld [vmem:[%s262 + $0x580] sm:$0xff]
        %v494 = vld [vmem:[%s262 + $0x588] sm:$0xff]
        %v495 = vld [vmem:[%s262 + $0x590] sm:$0xff]
        %v496 = vld [vmem:[%s262 + $0x598] sm:$0xff]
        %v497 = vld [vmem:[%s262 + $0x5a0] sm:$0xff]
        %v498 = vld [vmem:[%s262 + $0x5a8] sm:$0xff]
        %v499 = vld [vmem:[%s262 + $0x5b0] sm:$0xff]
        %v500 = vld [vmem:[%s262 + $0x5b8] sm:$0xff]
        %v501 = vld [vmem:[%s262 + $0x5c0] sm:$0xff]
        %v502 = vld [vmem:[%s262 + $0x5c8] sm:$0xff]
        %v503 = vld [vmem:[%s262 + $0x5d0] sm:$0xff]
        %v504 = vld [vmem:[%s262 + $0x5d8] sm:$0xff]
        %v505 = vld [vmem:[%s262 + $0x5e0] sm:$0xff]
        %v506 = vld [vmem:[%s262 + $0x5e8] sm:$0xff]
        %v507 = vld [vmem:[%s262 + $0x5f0] sm:$0xff]
        %v508 = vld [vmem:[%s262 + $0x5f8] sm:$0xff]
        %v509 = vld [vmem:[%s262 + $0x600] sm:$0xff]
        %v510 = vld [vmem:[%s262 + $0x608] sm:$0xff]
        %v511 = vld [vmem:[%s262 + $0x610] sm:$0xff]
        %v512 = vld [vmem:[%s262 + $0x618] sm:$0xff]
        %v513 = vld [vmem:[%s262 + $0x620] sm:$0xff]
        %v514 = vld [vmem:[%s262 + $0x628] sm:$0xff]
        %v515 = vld [vmem:[%s262 + $0x630] sm:$0xff]
        %v516 = vld [vmem:[%s262 + $0x638] sm:$0xff]
        %v517 = vld [vmem:[%s262 + $0x640] sm:$0xff]
        %v518 = vld [vmem:[%s262 + $0x648] sm:$0xff]
        %v519 = vld [vmem:[%s262 + $0x650] sm:$0xff]
        %v520 = vld [vmem:[%s262 + $0x658] sm:$0xff]
        %v521 = vld [vmem:[%s262 + $0x660] sm:$0xff]
        %v522 = vld [vmem:[%s262 + $0x668] sm:$0xff]
        %v523 = vld [vmem:[%s262 + $0x670] sm:$0xff]
        %v524 = vld [vmem:[%s262 + $0x678] sm:$0xff]
        %v525 = vld [vmem:[%s262 + $0x680] sm:$0xff]
        %v526 = vld [vmem:[%s262 + $0x688] sm:$0xff]
        %v527 = vld [vmem:[%s262 + $0x690] sm:$0xff]
        %v528 = vld [vmem:[%s262 + $0x698] sm:$0xff]
        %v529 = vld [vmem:[%s262 + $0x6a0] sm:$0xff]
        %v530 = vld [vmem:[%s262 + $0x6a8] sm:$0xff]
        %v531 = vld [vmem:[%s262 + $0x6b0] sm:$0xff]
        %v532 = vld [vmem:[%s262 + $0x6b8] sm:$0xff]
        %v533 = vld [vmem:[%s262 + $0x6c0] sm:$0xff]
        %v534 = vld [vmem:[%s262 + $0x6c8] sm:$0xff]
        %v535 = vld [vmem:[%s262 + $0x6d0] sm:$0xff]
        %v536 = vld [vmem:[%s262 + $0x6d8] sm:$0xff]
        %v537 = vld [vmem:[%s262 + $0x6e0] sm:$0xff]
        %v538 = vld [vmem:[%s262 + $0x6e8] sm:$0xff]
        %v539 = vld [vmem:[%s262 + $0x6f0] sm:$0xff]
        %v540 = vld [vmem:[%s262 + $0x6f8] sm:$0xff]
        %v541 = vpack.c.bf16 %v324, %v317
        %v542 = vpack.c.bf16 %v325, %v318
        %v543 = vpack.c.bf16 %v326, %v319
        %v544 = vpack.c.bf16 %v327, %v320
        %v545 = vpack.c.bf16 %v328, %v321
        %v546 = vpack.c.bf16 %v329, %v322
        %v547 = vpack.c.bf16 %v330, %v323
        %v548 = vpack.c.bf16 %v338, %v331
        %v549 = vpack.c.bf16 %v339, %v332
        %v550 = vpack.c.bf16 %v340, %v333
        %v551 = vpack.c.bf16 %v341, %v334
        %v552 = vpack.c.bf16 %v342, %v335
        %v553 = vpack.c.bf16 %v343, %v336
        %v554 = vpack.c.bf16 %v344, %v337
        %v555 = vpack.c.bf16 %v352, %v345
        %v556 = vpack.c.bf16 %v353, %v346
        %v557 = vpack.c.bf16 %v354, %v347
        %v558 = vpack.c.bf16 %v355, %v348
        %v559 = vpack.c.bf16 %v356, %v349
        %v560 = vpack.c.bf16 %v357, %v350
        %v561 = vpack.c.bf16 %v358, %v351
        %v562 = vpack.c.bf16 %v366, %v359
        %v563 = vpack.c.bf16 %v367, %v360
        %v564 = vpack.c.bf16 %v368, %v361
        %v565 = vpack.c.bf16 %v369, %v362
        %v566 = vpack.c.bf16 %v370, %v363
        %v567 = vpack.c.bf16 %v371, %v364
        %v568 = vpack.c.bf16 %v372, %v365
        %v569 = vpack.c.bf16 %v380, %v373
        %v570 = vpack.c.bf16 %v381, %v374
        %v571 = vpack.c.bf16 %v382, %v375
        %v572 = vpack.c.bf16 %v383, %v376
        %v573 = vpack.c.bf16 %v384, %v377
        %v574 = vpack.c.bf16 %v385, %v378
        %v575 = vpack.c.bf16 %v386, %v379
        %v576 = vpack.c.bf16 %v394, %v387
        %v577 = vpack.c.bf16 %v395, %v388
        %v578 = vpack.c.bf16 %v396, %v389
        %v579 = vpack.c.bf16 %v397, %v390
        %v580 = vpack.c.bf16 %v398, %v391
        %v581 = vpack.c.bf16 %v399, %v392
        %v582 = vpack.c.bf16 %v400, %v393
        %v583 = vpack.c.bf16 %v408, %v401
        %v584 = vpack.c.bf16 %v409, %v402
        %v585 = vpack.c.bf16 %v410, %v403
        %v586 = vpack.c.bf16 %v411, %v404
        %v587 = vpack.c.bf16 %v412, %v405
        %v588 = vpack.c.bf16 %v413, %v406
        %v589 = vpack.c.bf16 %v414, %v407
        %v590 = vpack.c.bf16 %v422, %v415
        %v591 = vpack.c.bf16 %v423, %v416
        %v592 = vpack.c.bf16 %v424, %v417
        %v593 = vpack.c.bf16 %v425, %v418
        %v594 = vpack.c.bf16 %v426, %v419
        %v595 = vpack.c.bf16 %v427, %v420
        %v596 = vpack.c.bf16 %v428, %v421
        %v597 = vpack.c.bf16 %v436, %v429
        %v598 = vpack.c.bf16 %v437, %v430
        %v599 = vpack.c.bf16 %v438, %v431
        %v600 = vpack.c.bf16 %v439, %v432
        %v601 = vpack.c.bf16 %v440, %v433
        %v602 = vpack.c.bf16 %v441, %v434
        %v603 = vpack.c.bf16 %v442, %v435
        %v604 = vpack.c.bf16 %v450, %v443
        %v605 = vpack.c.bf16 %v451, %v444
        %v606 = vpack.c.bf16 %v452, %v445
        %v607 = vpack.c.bf16 %v453, %v446
        %v608 = vpack.c.bf16 %v454, %v447
        %v609 = vpack.c.bf16 %v455, %v448
        %v610 = vpack.c.bf16 %v456, %v449
        %v611 = vpack.c.bf16 %v464, %v457
        %v612 = vpack.c.bf16 %v465, %v458
        %v613 = vpack.c.bf16 %v466, %v459
        %v614 = vpack.c.bf16 %v467, %v460
        %v615 = vpack.c.bf16 %v468, %v461
        %v616 = vpack.c.bf16 %v469, %v462
        %v617 = vpack.c.bf16 %v470, %v463
        %v618 = vpack.c.bf16 %v478, %v471
        %v619 = vpack.c.bf16 %v479, %v472
        %v620 = vpack.c.bf16 %v480, %v473
        %v621 = vpack.c.bf16 %v481, %v474
        %v622 = vpack.c.bf16 %v482, %v475
        %v623 = vpack.c.bf16 %v483, %v476
        %v624 = vpack.c.bf16 %v484, %v477
        %v625 = vpack.c.bf16 %v492, %v485
        %v626 = vpack.c.bf16 %v493, %v486
        %v627 = vpack.c.bf16 %v494, %v487
        %v628 = vpack.c.bf16 %v495, %v488
        %v629 = vpack.c.bf16 %v496, %v489
        %v630 = vpack.c.bf16 %v497, %v490
        %v631 = vpack.c.bf16 %v498, %v491
        %v632 = vpack.c.bf16 %v506, %v499
        %v633 = vpack.c.bf16 %v507, %v500
        %v634 = vpack.c.bf16 %v508, %v501
        %v635 = vpack.c.bf16 %v509, %v502
        %v636 = vpack.c.bf16 %v510, %v503
        %v637 = vpack.c.bf16 %v511, %v504
        %v638 = vpack.c.bf16 %v512, %v505
        %v639 = vpack.c.bf16 %v520, %v513
        %v640 = vpack.c.bf16 %v521, %v514
        %v641 = vpack.c.bf16 %v522, %v515
        %v642 = vpack.c.bf16 %v523, %v516
        %v643 = vpack.c.bf16 %v524, %v517
        %v644 = vpack.c.bf16 %v525, %v518
        %v645 = vpack.c.bf16 %v526, %v519
        %v646 = vpack.c.bf16 %v534, %v527
        %v647 = vpack.c.bf16 %v535, %v528
        %v648 = vpack.c.bf16 %v536, %v529
        %v649 = vpack.c.bf16 %v537, %v530
        %v650 = vpack.c.bf16 %v538, %v531
        %v651 = vpack.c.bf16 %v539, %v532
        %v652 = vpack.c.bf16 %v540, %v533
        %v653 = vld [vmem:[#allocation5] sm:$0xf]
        %v654 = vld [vmem:[#allocation5 + $0x4] sm:$0xf]
        %v655 = vld [vmem:[#allocation5 + $0x8] sm:$0xf]
        %v656 = vld [vmem:[#allocation5 + $0xc] sm:$0xf]
        %v657 = vld [vmem:[#allocation5 + $0x10] sm:$0xf]
        %v658 = vld [vmem:[#allocation5 + $0x14] sm:$0xf]
        %v659 = vld [vmem:[#allocation5 + $0x18] sm:$0xf]
        %v660 = vld [vmem:[#allocation5 + $0x1c] sm:$0xf]
        %v661 = vld [vmem:[#allocation5 + $0x20] sm:$0xf]
        %v662 = vld [vmem:[#allocation5 + $0x24] sm:$0xf]
        %v663 = vld [vmem:[#allocation5 + $0x28] sm:$0xf]
        %v664 = vld [vmem:[#allocation5 + $0x2c] sm:$0xf]
        %v665 = vld [vmem:[#allocation5 + $0x30] sm:$0xf]
        %v666 = vld [vmem:[#allocation5 + $0x34] sm:$0xf]
        %v667 = vld [vmem:[#allocation5 + $0x38] sm:$0xf]
        %v668 = vld [vmem:[#allocation5 + $0x3c] sm:$0xf]
        %v669 = vld [vmem:[#allocation5 + $0x40] sm:$0xf]
        %v670 = vld [vmem:[#allocation5 + $0x44] sm:$0xf]
        %v671 = vld [vmem:[#allocation5 + $0x48] sm:$0xf]
        %v672 = vld [vmem:[#allocation5 + $0x4c] sm:$0xf]
        %v673 = vld [vmem:[#allocation5 + $0x50] sm:$0xf]
        %v674 = vld [vmem:[#allocation5 + $0x54] sm:$0xf]
        %v675 = vld [vmem:[#allocation5 + $0x58] sm:$0xf]
        %v676 = vld [vmem:[#allocation5 + $0x5c] sm:$0xf]
        %v677 = vld [vmem:[#allocation5 + $0x60] sm:$0xf]
        %v678 = vld [vmem:[#allocation5 + $0x64] sm:$0xf]
        %v679 = vld [vmem:[#allocation5 + $0x68] sm:$0xf]
        %v680 = vld [vmem:[#allocation5 + $0x6c] sm:$0xf]
        %v681 = vld [vmem:[#allocation5 + $0x70] sm:$0xf]
        %v682 = vld [vmem:[#allocation5 + $0x74] sm:$0xf]
        %v683 = vld [vmem:[#allocation5 + $0x78] sm:$0xf]
        %v684 = vld [vmem:[#allocation5 + $0x7c] sm:$0xf]
        %v685 = vld [vmem:[#allocation5 + $0x80] sm:$0xf]
        %v686 = vld [vmem:[#allocation5 + $0x84] sm:$0xf]
        %v687 = vld [vmem:[#allocation5 + $0x88] sm:$0xf]
        %v688 = vld [vmem:[#allocation5 + $0x8c] sm:$0xf]
        %v689 = vld [vmem:[#allocation5 + $0x90] sm:$0xf]
        %v690 = vld [vmem:[#allocation5 + $0x94] sm:$0xf]
        %v691 = vld [vmem:[#allocation5 + $0x98] sm:$0xf]
        %v692 = vld [vmem:[#allocation5 + $0x9c] sm:$0xf]
        %v693 = vld [vmem:[#allocation5 + $0xa0] sm:$0xf]
        %v694 = vld [vmem:[#allocation5 + $0xa4] sm:$0xf]
        %v695 = vld [vmem:[#allocation5 + $0xa8] sm:$0xf]
        %v696 = vld [vmem:[#allocation5 + $0xac] sm:$0xf]
        %v697 = vld [vmem:[#allocation5 + $0xb0] sm:$0xf]
        %v698 = vld [vmem:[#allocation5 + $0xb4] sm:$0xf]
        %v699 = vld [vmem:[#allocation5 + $0xb8] sm:$0xf]
        %v700 = vld [vmem:[#allocation5 + $0xbc] sm:$0xf]
        %v701 = vld [vmem:[#allocation5 + $0xc0] sm:$0xf]
        %v702 = vld [vmem:[#allocation5 + $0xc4] sm:$0xf]
        %v703 = vld [vmem:[#allocation5 + $0xc8] sm:$0xf]
        %v704 = vld [vmem:[#allocation5 + $0xcc] sm:$0xf]
        %v705 = vld [vmem:[#allocation5 + $0xd0] sm:$0xf]
        %v706 = vld [vmem:[#allocation5 + $0xd4] sm:$0xf]
        %v707 = vld [vmem:[#allocation5 + $0xd8] sm:$0xf]
        %v708 = vld [vmem:[#allocation5 + $0xdc] sm:$0xf]
        %v709 = vld [vmem:[#allocation5 + $0xe0] sm:$0xf]
        %v710 = vld [vmem:[#allocation5 + $0xe4] sm:$0xf]
        %v711 = vld [vmem:[#allocation5 + $0xe8] sm:$0xf]
        %v712 = vld [vmem:[#allocation5 + $0xec] sm:$0xf]
        %v713 = vld [vmem:[#allocation5 + $0xf0] sm:$0xf]
        %v714 = vld [vmem:[#allocation5 + $0xf4] sm:$0xf]
        %v715 = vld [vmem:[#allocation5 + $0xf8] sm:$0xf]
        %v716 = vld [vmem:[#allocation5 + $0xfc] sm:$0xf]
        %v717 = vld [vmem:[#allocation5 + $0x100] sm:$0xf]
        %v718 = vld [vmem:[#allocation5 + $0x104] sm:$0xf]
        %v719 = vld [vmem:[#allocation5 + $0x108] sm:$0xf]
        %v720 = vld [vmem:[#allocation5 + $0x10c] sm:$0xf]
        %v721 = vld [vmem:[#allocation5 + $0x110] sm:$0xf]
        %v722 = vld [vmem:[#allocation5 + $0x114] sm:$0xf]
        %v723 = vld [vmem:[#allocation5 + $0x118] sm:$0xf]
        %v724 = vld [vmem:[#allocation5 + $0x11c] sm:$0xf]
        %v725 = vld [vmem:[#allocation5 + $0x120] sm:$0xf]
        %v726 = vld [vmem:[#allocation5 + $0x124] sm:$0xf]
        %v727 = vld [vmem:[#allocation5 + $0x128] sm:$0xf]
        %v728 = vld [vmem:[#allocation5 + $0x12c] sm:$0xf]
        %v729 = vld [vmem:[#allocation5 + $0x130] sm:$0xf]
        %v730 = vld [vmem:[#allocation5 + $0x134] sm:$0xf]
        %v731 = vld [vmem:[#allocation5 + $0x138] sm:$0xf]
        %v732 = vld [vmem:[#allocation5 + $0x13c] sm:$0xf]
        %v733 = vld [vmem:[#allocation5 + $0x140] sm:$0xf]
        %v734 = vld [vmem:[#allocation5 + $0x144] sm:$0xf]
        %v735 = vld [vmem:[#allocation5 + $0x148] sm:$0xf]
        %v736 = vld [vmem:[#allocation5 + $0x14c] sm:$0xf]
        %v737 = vld [vmem:[#allocation5 + $0x150] sm:$0xf]
        %v738 = vld [vmem:[#allocation5 + $0x154] sm:$0xf]
        %v739 = vld [vmem:[#allocation5 + $0x158] sm:$0xf]
        %v740 = vld [vmem:[#allocation5 + $0x15c] sm:$0xf]
        %v741 = vld [vmem:[#allocation5 + $0x160] sm:$0xf]
        %v742 = vld [vmem:[#allocation5 + $0x164] sm:$0xf]
        %v743 = vld [vmem:[#allocation5 + $0x168] sm:$0xf]
        %v744 = vld [vmem:[#allocation5 + $0x16c] sm:$0xf]
        %v745 = vld [vmem:[#allocation5 + $0x170] sm:$0xf]
        %v746 = vld [vmem:[#allocation5 + $0x174] sm:$0xf]
        %v747 = vld [vmem:[#allocation5 + $0x178] sm:$0xf]
        %v748 = vld [vmem:[#allocation5 + $0x17c] sm:$0xf]
        %v749 = vld [vmem:[#allocation5 + $0x180] sm:$0xf]
        %v750 = vld [vmem:[#allocation5 + $0x184] sm:$0xf]
        %v751 = vld [vmem:[#allocation7] sm:$0x1]
        %v753 = vlaneseq
        %v754 = vshrl.u32 %v753, 7
        %v755 = vsub.s32 0, %v754
        %v756 = vrot.slane %v751, %v755
        %v856 = vunpack.c.l.b16 %v653
        %v857 = vunpack.c.l.b16 %v654
        %v858 = vunpack.c.l.b16 %v655
        %v859 = vunpack.c.l.b16 %v656
        %v860 = vunpack.c.l.b16 %v657
        %v861 = vunpack.c.l.b16 %v658
        %v862 = vunpack.c.l.b16 %v659
        %v863 = vunpack.c.l.b16 %v660
        %v864 = vunpack.c.l.b16 %v661
        %v865 = vunpack.c.l.b16 %v662
        %v866 = vunpack.c.l.b16 %v663
        %v867 = vunpack.c.l.b16 %v664
        %v868 = vunpack.c.l.b16 %v665
        %v869 = vunpack.c.l.b16 %v666
        %v870 = vunpack.c.l.b16 %v667
        %v871 = vunpack.c.l.b16 %v668
        %v872 = vunpack.c.l.b16 %v669
        %v873 = vunpack.c.l.b16 %v670
        %v874 = vunpack.c.l.b16 %v671
        %v875 = vunpack.c.l.b16 %v672
        %v876 = vunpack.c.l.b16 %v673
        %v877 = vunpack.c.l.b16 %v674
        %v878 = vunpack.c.l.b16 %v675
        %v879 = vunpack.c.l.b16 %v676
        %v880 = vunpack.c.l.b16 %v677
        %v881 = vunpack.c.l.b16 %v678
        %v882 = vunpack.c.l.b16 %v679
        %v883 = vunpack.c.l.b16 %v680
        %v884 = vunpack.c.l.b16 %v681
        %v885 = vunpack.c.l.b16 %v682
        %v886 = vunpack.c.l.b16 %v683
        %v887 = vunpack.c.l.b16 %v684
        %v888 = vunpack.c.l.b16 %v685
        %v889 = vunpack.c.l.b16 %v686
        %v890 = vunpack.c.l.b16 %v687
        %v891 = vunpack.c.l.b16 %v688
        %v892 = vunpack.c.l.b16 %v689
        %v893 = vunpack.c.l.b16 %v690
        %v894 = vunpack.c.l.b16 %v691
        %v895 = vunpack.c.l.b16 %v692
        %v896 = vunpack.c.l.b16 %v693
        %v897 = vunpack.c.l.b16 %v694
        %v898 = vunpack.c.l.b16 %v695
        %v899 = vunpack.c.l.b16 %v696
        %v900 = vunpack.c.l.b16 %v697
        %v901 = vunpack.c.l.b16 %v698
        %v902 = vunpack.c.l.b16 %v699
        %v903 = vunpack.c.l.b16 %v700
        %v904 = vunpack.c.l.b16 %v701
        %v905 = vunpack.c.l.b16 %v702
        %v906 = vunpack.c.l.b16 %v703
        %v907 = vunpack.c.l.b16 %v704
        %v908 = vunpack.c.l.b16 %v705
        %v909 = vunpack.c.l.b16 %v706
        %v910 = vunpack.c.l.b16 %v707
        %v911 = vunpack.c.l.b16 %v708
        %v912 = vunpack.c.l.b16 %v709
        %v913 = vunpack.c.l.b16 %v710
        %v914 = vunpack.c.l.b16 %v711
        %v915 = vunpack.c.l.b16 %v712
        %v916 = vunpack.c.l.b16 %v713
        %v917 = vunpack.c.l.b16 %v714
        %v918 = vunpack.c.l.b16 %v715
        %v919 = vunpack.c.l.b16 %v716
        %v920 = vunpack.c.l.b16 %v717
        %v921 = vunpack.c.l.b16 %v718
        %v922 = vunpack.c.l.b16 %v719
        %v923 = vunpack.c.l.b16 %v720
        %v924 = vunpack.c.l.b16 %v721
        %v925 = vunpack.c.l.b16 %v722
        %v926 = vunpack.c.l.b16 %v723
        %v927 = vunpack.c.l.b16 %v724
        %v928 = vunpack.c.l.b16 %v725
        %v929 = vunpack.c.l.b16 %v726
        %v930 = vunpack.c.l.b16 %v727
        %v931 = vunpack.c.l.b16 %v728
        %v932 = vunpack.c.l.b16 %v729
        %v933 = vunpack.c.l.b16 %v730
        %v934 = vunpack.c.l.b16 %v731
        %v935 = vunpack.c.l.b16 %v732
        %v936 = vunpack.c.l.b16 %v733
        %v937 = vunpack.c.l.b16 %v734
        %v938 = vunpack.c.l.b16 %v735
        %v939 = vunpack.c.l.b16 %v736
        %v940 = vunpack.c.l.b16 %v737
        %v941 = vunpack.c.l.b16 %v738
        %v942 = vunpack.c.l.b16 %v739
        %v943 = vunpack.c.l.b16 %v740
        %v944 = vunpack.c.l.b16 %v741
        %v945 = vunpack.c.l.b16 %v742
        %v946 = vunpack.c.l.b16 %v743
        %v947 = vunpack.c.l.b16 %v744
        %v948 = vunpack.c.l.b16 %v745
        %v949 = vunpack.c.l.b16 %v746
        %v950 = vunpack.c.l.b16 %v747
        %v951 = vunpack.c.l.b16 %v748
        %v952 = vunpack.c.l.b16 %v749
        %v953 = vunpack.c.l.b16 %v750
        %v954 = vpack.c.b16 %v857, %v856
        %v955 = vpack.c.b16 %v859, %v858
        %v956 = vpack.c.b16 %v861, %v860
        %v957 = vpack.c.b16 %v863, %v862
        %v958 = vpack.c.b16 %v865, %v864
        %v959 = vpack.c.b16 %v867, %v866
        %v960 = vpack.c.b16 %v869, %v868
        %v961 = vpack.c.b16 %v871, %v870
        %v962 = vpack.c.b16 %v873, %v872
        %v963 = vpack.c.b16 %v875, %v874
        %v964 = vpack.c.b16 %v877, %v876
        %v965 = vpack.c.b16 %v879, %v878
        %v966 = vpack.c.b16 %v881, %v880
        %v967 = vpack.c.b16 %v883, %v882
        %v968 = vpack.c.b16 %v885, %v884
        %v969 = vpack.c.b16 %v887, %v886
        %v970 = vpack.c.b16 %v889, %v888
        %v971 = vpack.c.b16 %v891, %v890
        %v972 = vpack.c.b16 %v893, %v892
        %v973 = vpack.c.b16 %v895, %v894
        %v974 = vpack.c.b16 %v897, %v896
        %v975 = vpack.c.b16 %v899, %v898
        %v976 = vpack.c.b16 %v901, %v900
        %v977 = vpack.c.b16 %v903, %v902
        %v978 = vpack.c.b16 %v905, %v904
        %v979 = vpack.c.b16 %v907, %v906
        %v980 = vpack.c.b16 %v909, %v908
        %v981 = vpack.c.b16 %v911, %v910
        %v982 = vpack.c.b16 %v913, %v912
        %v983 = vpack.c.b16 %v915, %v914
        %v984 = vpack.c.b16 %v917, %v916
        %v985 = vpack.c.b16 %v919, %v918
        %v986 = vpack.c.b16 %v921, %v920
        %v987 = vpack.c.b16 %v923, %v922
        %v988 = vpack.c.b16 %v925, %v924
        %v989 = vpack.c.b16 %v927, %v926
        %v990 = vpack.c.b16 %v929, %v928
        %v991 = vpack.c.b16 %v931, %v930
        %v992 = vpack.c.b16 %v933, %v932
        %v993 = vpack.c.b16 %v935, %v934
        %v994 = vpack.c.b16 %v937, %v936
        %v995 = vpack.c.b16 %v939, %v938
        %v996 = vpack.c.b16 %v941, %v940
        %v997 = vpack.c.b16 %v943, %v942
        %v998 = vpack.c.b16 %v945, %v944
        %v999 = vpack.c.b16 %v947, %v946
        %v1000 = vpack.c.b16 %v949, %v948
        %v1001 = vpack.c.b16 %v951, %v950
        %v1002 = vpack.c.b16 %v953, %v952
        %vm1052 = vcmask 130048
        %v1054 = vsel %vm1052, %v547, 0
        %v1057 = vsel %vm1052, %v554, 0
        %v1060 = vsel %vm1052, %v561, 0
        %v1063 = vsel %vm1052, %v568, 0
        %v1066 = vsel %vm1052, %v575, 0
        %v1069 = vsel %vm1052, %v582, 0
        %v1072 = vsel %vm1052, %v589, 0
        %v1075 = vsel %vm1052, %v596, 0
        %v1078 = vsel %vm1052, %v603, 0
        %v1081 = vsel %vm1052, %v610, 0
        %v1084 = vsel %vm1052, %v617, 0
        %v1087 = vsel %vm1052, %v624, 0
        %v1090 = vsel %vm1052, %v631, 0
        %v1093 = vsel %vm1052, %v638, 0
        %v1096 = vsel %vm1052, %v645, 0
        %v1099 = vsel %vm1052, %v652, 0
        %1101 = vmatprep.subr.bf16.mxu0 0
        %1102 = vmatpush1.bf16.msra.mxu0 %v961
        %1103 = vmatprep.subr.bf16.mxu0 0
        %1104 = vmatpush1.bf16.msra.mxu0 %v960
        %1105 = vmatprep.subr.bf16.mxu0 0
        %1106 = vmatpush1.bf16.msra.mxu0 %v959
        %1107 = vmatprep.subr.bf16.mxu0 0
        %1108 = vmatpush1.bf16.msra.mxu0 %v958
        %1109 = vmatprep.subr.bf16.mxu0 0
        %1110 = vmatpush1.bf16.msra.mxu0 %v957
        %1111 = vmatprep.subr.bf16.mxu0 0
        %1112 = vmatpush1.bf16.msra.mxu0 %v956
        %1113 = vmatprep.subr.bf16.mxu0 0
        %1114 = vmatpush1.bf16.msra.mxu0 %v955
        %1115 = vmatprep.subr.bf16.mxu0 0
        %1116 = vmatpush1.bf16.msra.mxu0 %v954
        %1117 = vmatprep.subr.bf16.mxu0 0
        %1118 = vmatpush2.bf16.msra.mxu0 %v969
        %1119 = vmatprep.subr.bf16.mxu0 0
        %1120 = vmatpush2.bf16.msra.mxu0 %v968
        %1121 = vmatprep.subr.bf16.mxu0 0
        %1122 = vmatpush2.bf16.msra.mxu0 %v967
        %1123 = vmatprep.subr.bf16.mxu0 0
        %1124 = vmatpush2.bf16.msra.mxu0 %v966
        %1125 = vmatprep.subr.bf16.mxu0 0
        %1126 = vmatpush2.bf16.msra.mxu0 %v965
        %1127 = vmatprep.subr.bf16.mxu0 0
        %1128 = vmatpush2.bf16.msra.mxu0 %v964
        %1129 = vmatprep.subr.bf16.mxu0 0
        %1130 = vmatpush2.bf16.msra.mxu0 %v963
        %1131 = vmatprep.subr.bf16.mxu0 0
        %1132 = vmatpush2.bf16.msra.mxu0 %v962
        %1133 = vmatprep.mubr.bf16.mxu0 %v542
        %1134 = vmatmul.mubr.bf16.gmra.mxu0 %v541
        %v1135 = vpop.f32.mrf.mxu0
        %v1136 = vadd.f32 %v756, %v1135
        %v1137 = vpop.f32.mrf.mxu0
        %v1138 = vpop.f32.mrf.mxu0
        %v1139 = vadd.f32 %v756, %v1138
        %v1140 = vpop.f32.mrf.mxu0
        %1141 = vmatprep.mubr.bf16.mxu0 %v549
        %1142 = vmatmul.mubr.bf16.gmra.mxu0 %v548
        %v1143 = vpop.f32.mrf.mxu0
        %v1144 = vadd.f32 %v756, %v1143
        %v1145 = vpop.f32.mrf.mxu0
        %v1146 = vpop.f32.mrf.mxu0
        %v1147 = vadd.f32 %v756, %v1146
        %v1148 = vpop.f32.mrf.mxu0
        %1149 = vmatprep.mubr.bf16.mxu0 %v556
        %1150 = vmatmul.mubr.bf16.gmra.mxu0 %v555
        %v1151 = vpop.f32.mrf.mxu0
        %v1152 = vadd.f32 %v756, %v1151
        %v1153 = vpop.f32.mrf.mxu0
        %v1154 = vpop.f32.mrf.mxu0
        %v1155 = vadd.f32 %v756, %v1154
        %v1156 = vpop.f32.mrf.mxu0
        %1157 = vmatprep.mubr.bf16.mxu0 %v563
        %1158 = vmatmul.mubr.bf16.gmra.mxu0 %v562
        %v1159 = vpop.f32.mrf.mxu0
        %v1160 = vadd.f32 %v756, %v1159
        %v1161 = vpop.f32.mrf.mxu0
        %v1162 = vpop.f32.mrf.mxu0
        %v1163 = vadd.f32 %v756, %v1162
        %v1164 = vpop.f32.mrf.mxu0
        %1165 = vmatprep.mubr.bf16.mxu0 %v570
        %1166 = vmatmul.mubr.bf16.gmra.mxu0 %v569
        %v1167 = vpop.f32.mrf.mxu0
        %v1168 = vadd.f32 %v756, %v1167
        %v1169 = vpop.f32.mrf.mxu0
        %v1170 = vpop.f32.mrf.mxu0
        %v1171 = vadd.f32 %v756, %v1170
        %v1172 = vpop.f32.mrf.mxu0
        %1173 = vmatprep.mubr.bf16.mxu0 %v577
        %1174 = vmatmul.mubr.bf16.gmra.mxu0 %v576
        %v1175 = vpop.f32.mrf.mxu0
        %v1176 = vadd.f32 %v756, %v1175
        %v1177 = vpop.f32.mrf.mxu0
        %v1178 = vpop.f32.mrf.mxu0
        %v1179 = vadd.f32 %v756, %v1178
        %v1180 = vpop.f32.mrf.mxu0
        %1181 = vmatprep.mubr.bf16.mxu0 %v584
        %1182 = vmatmul.mubr.bf16.gmra.mxu0 %v583
        %v1183 = vpop.f32.mrf.mxu0
        %v1184 = vadd.f32 %v756, %v1183
        %v1185 = vpop.f32.mrf.mxu0
        %v1186 = vpop.f32.mrf.mxu0
        %v1187 = vadd.f32 %v756, %v1186
        %v1188 = vpop.f32.mrf.mxu0
        %1189 = vmatprep.mubr.bf16.mxu0 %v591
        %1190 = vmatmul.mubr.bf16.gmra.mxu0 %v590
        %v1191 = vpop.f32.mrf.mxu0
        %v1192 = vadd.f32 %v756, %v1191
        %v1193 = vpop.f32.mrf.mxu0
        %v1194 = vpop.f32.mrf.mxu0
        %v1195 = vadd.f32 %v756, %v1194
        %v1196 = vpop.f32.mrf.mxu0
        %1197 = vmatprep.mubr.bf16.mxu0 %v598
        %1198 = vmatmul.mubr.bf16.gmra.mxu0 %v597
        %v1199 = vpop.f32.mrf.mxu0
        %v1200 = vadd.f32 %v756, %v1199
        %v1201 = vpop.f32.mrf.mxu0
        %v1202 = vpop.f32.mrf.mxu0
        %v1203 = vadd.f32 %v756, %v1202
        %v1204 = vpop.f32.mrf.mxu0
        %1205 = vmatprep.mubr.bf16.mxu0 %v605
        %1206 = vmatmul.mubr.bf16.gmra.mxu0 %v604
        %v1207 = vpop.f32.mrf.mxu0
        %v1208 = vadd.f32 %v756, %v1207
        %v1209 = vpop.f32.mrf.mxu0
        %v1210 = vpop.f32.mrf.mxu0
        %v1211 = vadd.f32 %v756, %v1210
        %v1212 = vpop.f32.mrf.mxu0
        %1213 = vmatprep.mubr.bf16.mxu0 %v612
        %1214 = vmatmul.mubr.bf16.gmra.mxu0 %v611
        %v1215 = vpop.f32.mrf.mxu0
        %v1216 = vadd.f32 %v756, %v1215
        %v1217 = vpop.f32.mrf.mxu0
        %v1218 = vpop.f32.mrf.mxu0
        %v1219 = vadd.f32 %v756, %v1218
        %v1220 = vpop.f32.mrf.mxu0
        %1221 = vmatprep.mubr.bf16.mxu0 %v619
        %1222 = vmatmul.mubr.bf16.gmra.mxu0 %v618
        %v1223 = vpop.f32.mrf.mxu0
        %v1224 = vadd.f32 %v756, %v1223
        %v1225 = vpop.f32.mrf.mxu0
        %v1226 = vpop.f32.mrf.mxu0
        %v1227 = vadd.f32 %v756, %v1226
        %v1228 = vpop.f32.mrf.mxu0
        %1229 = vmatprep.mubr.bf16.mxu0 %v626
        %1230 = vmatmul.mubr.bf16.gmra.mxu0 %v625
        %v1231 = vpop.f32.mrf.mxu0
        %v1232 = vadd.f32 %v756, %v1231
        %v1233 = vpop.f32.mrf.mxu0
        %v1234 = vpop.f32.mrf.mxu0
        %v1235 = vadd.f32 %v756, %v1234
        %v1236 = vpop.f32.mrf.mxu0
        %1237 = vmatprep.mubr.bf16.mxu0 %v633
        %1238 = vmatmul.mubr.bf16.gmra.mxu0 %v632
        %v1239 = vpop.f32.mrf.mxu0
        %v1240 = vadd.f32 %v756, %v1239
        %v1241 = vpop.f32.mrf.mxu0
        %v1242 = vpop.f32.mrf.mxu0
        %v1243 = vadd.f32 %v756, %v1242
        %v1244 = vpop.f32.mrf.mxu0
        %1245 = vmatprep.mubr.bf16.mxu0 %v640
        %1246 = vmatmul.mubr.bf16.gmra.mxu0 %v639
        %v1247 = vpop.f32.mrf.mxu0
        %v1248 = vadd.f32 %v756, %v1247
        %v1249 = vpop.f32.mrf.mxu0
        %v1250 = vpop.f32.mrf.mxu0
        %v1251 = vadd.f32 %v756, %v1250
        %v1252 = vpop.f32.mrf.mxu0
        %1253 = vmatprep.mubr.bf16.mxu0 %v647
        %1254 = vmatmul.mubr.bf16.gmra.mxu0 %v646
        %v1255 = vpop.f32.mrf.mxu0
        %v1256 = vadd.f32 %v756, %v1255
        %v1257 = vpop.f32.mrf.mxu0
        %v1258 = vpop.f32.mrf.mxu0
        %v1259 = vadd.f32 %v756, %v1258
        %v1260 = vpop.f32.mrf.mxu0
        %1261 = vdwg.mxu0
        %1262 = vmatprep.subr.bf16.mxu0 0
        %1263 = vmatpush1.bf16.msra.mxu0 %v977
        %1264 = vmatprep.subr.bf16.mxu0 0
        %1265 = vmatpush1.bf16.msra.mxu0 %v976
        %1266 = vmatprep.subr.bf16.mxu0 0
        %1267 = vmatpush1.bf16.msra.mxu0 %v975
        %1268 = vmatprep.subr.bf16.mxu0 0
        %1269 = vmatpush1.bf16.msra.mxu0 %v974
        %1270 = vmatprep.subr.bf16.mxu0 0
        %1271 = vmatpush1.bf16.msra.mxu0 %v973
        %1272 = vmatprep.subr.bf16.mxu0 0
        %1273 = vmatpush1.bf16.msra.mxu0 %v972
        %1274 = vmatprep.subr.bf16.mxu0 0
        %1275 = vmatpush1.bf16.msra.mxu0 %v971
        %1276 = vmatprep.subr.bf16.mxu0 0
        %1277 = vmatpush1.bf16.msra.mxu0 %v970
        %1278 = vmatprep.subr.bf16.mxu0 0
        %1279 = vmatpush2.bf16.msra.mxu0 %v985
        %1280 = vmatprep.subr.bf16.mxu0 0
        %1281 = vmatpush2.bf16.msra.mxu0 %v984
        %1282 = vmatprep.subr.bf16.mxu0 0
        %1283 = vmatpush2.bf16.msra.mxu0 %v983
        %1284 = vmatprep.subr.bf16.mxu0 0
        %1285 = vmatpush2.bf16.msra.mxu0 %v982
        %1286 = vmatprep.subr.bf16.mxu0 0
        %1287 = vmatpush2.bf16.msra.mxu0 %v981
        %1288 = vmatprep.subr.bf16.mxu0 0
        %1289 = vmatpush2.bf16.msra.mxu0 %v980
        %1290 = vmatprep.subr.bf16.mxu0 0
        %1291 = vmatpush2.bf16.msra.mxu0 %v979
        %1292 = vmatprep.subr.bf16.mxu0 0
        %1293 = vmatpush2.bf16.msra.mxu0 %v978
        %1294 = vmatprep.mubr.bf16.mxu0 %v544
        %1295 = vmatmul.mubr.bf16.gmra.mxu0 %v543
        %v1296 = vpop.f32.mrf.mxu0
        %v1297 = vadd.f32 %v1136, %v1296
        %v1298 = vpop.f32.mrf.mxu0
        %v1299 = vpop.f32.mrf.mxu0
        %v1300 = vadd.f32 %v1139, %v1299
        %v1301 = vpop.f32.mrf.mxu0
        %1302 = vmatprep.mubr.bf16.mxu0 %v551
        %1303 = vmatmul.mubr.bf16.gmra.mxu0 %v550
        %v1304 = vpop.f32.mrf.mxu0
        %v1305 = vadd.f32 %v1144, %v1304
        %v1306 = vpop.f32.mrf.mxu0
        %v1307 = vpop.f32.mrf.mxu0
        %v1308 = vadd.f32 %v1147, %v1307
        %v1309 = vpop.f32.mrf.mxu0
        %1310 = vmatprep.mubr.bf16.mxu0 %v558
        %1311 = vmatmul.mubr.bf16.gmra.mxu0 %v557
        %v1312 = vpop.f32.mrf.mxu0
        %v1313 = vadd.f32 %v1152, %v1312
        %v1314 = vpop.f32.mrf.mxu0
        %v1315 = vpop.f32.mrf.mxu0
        %v1316 = vadd.f32 %v1155, %v1315
        %v1317 = vpop.f32.mrf.mxu0
        %1318 = vmatprep.mubr.bf16.mxu0 %v565
        %1319 = vmatmul.mubr.bf16.gmra.mxu0 %v564
        %v1320 = vpop.f32.mrf.mxu0
        %v1321 = vadd.f32 %v1160, %v1320
        %v1322 = vpop.f32.mrf.mxu0
        %v1323 = vpop.f32.mrf.mxu0
        %v1324 = vadd.f32 %v1163, %v1323
        %v1325 = vpop.f32.mrf.mxu0
        %1326 = vmatprep.mubr.bf16.mxu0 %v572
        %1327 = vmatmul.mubr.bf16.gmra.mxu0 %v571
        %v1328 = vpop.f32.mrf.mxu0
        %v1329 = vadd.f32 %v1168, %v1328
        %v1330 = vpop.f32.mrf.mxu0
        %v1331 = vpop.f32.mrf.mxu0
        %v1332 = vadd.f32 %v1171, %v1331
        %v1333 = vpop.f32.mrf.mxu0
        %1334 = vmatprep.mubr.bf16.mxu0 %v579
        %1335 = vmatmul.mubr.bf16.gmra.mxu0 %v578
        %v1336 = vpop.f32.mrf.mxu0
        %v1337 = vadd.f32 %v1176, %v1336
        %v1338 = vpop.f32.mrf.mxu0
        %v1339 = vpop.f32.mrf.mxu0
        %v1340 = vadd.f32 %v1179, %v1339
        %v1341 = vpop.f32.mrf.mxu0
        %1342 = vmatprep.mubr.bf16.mxu0 %v586
        %1343 = vmatmul.mubr.bf16.gmra.mxu0 %v585
        %v1344 = vpop.f32.mrf.mxu0
        %v1345 = vadd.f32 %v1184, %v1344
        %v1346 = vpop.f32.mrf.mxu0
        %v1347 = vpop.f32.mrf.mxu0
        %v1348 = vadd.f32 %v1187, %v1347
        %v1349 = vpop.f32.mrf.mxu0
        %1350 = vmatprep.mubr.bf16.mxu0 %v593
        %1351 = vmatmul.mubr.bf16.gmra.mxu0 %v592
        %v1352 = vpop.f32.mrf.mxu0
        %v1353 = vadd.f32 %v1192, %v1352
        %v1354 = vpop.f32.mrf.mxu0
        %v1355 = vpop.f32.mrf.mxu0
        %v1356 = vadd.f32 %v1195, %v1355
        %v1357 = vpop.f32.mrf.mxu0
        %1358 = vmatprep.mubr.bf16.mxu0 %v600
        %1359 = vmatmul.mubr.bf16.gmra.mxu0 %v599
        %v1360 = vpop.f32.mrf.mxu0
        %v1361 = vadd.f32 %v1200, %v1360
        %v1362 = vpop.f32.mrf.mxu0
        %v1363 = vpop.f32.mrf.mxu0
        %v1364 = vadd.f32 %v1203, %v1363
        %v1365 = vpop.f32.mrf.mxu0
        %1366 = vmatprep.mubr.bf16.mxu0 %v607
        %1367 = vmatmul.mubr.bf16.gmra.mxu0 %v606
        %v1368 = vpop.f32.mrf.mxu0
        %v1369 = vadd.f32 %v1208, %v1368
        %v1370 = vpop.f32.mrf.mxu0
        %v1371 = vpop.f32.mrf.mxu0
        %v1372 = vadd.f32 %v1211, %v1371
        %v1373 = vpop.f32.mrf.mxu0
        %1374 = vmatprep.mubr.bf16.mxu0 %v614
        %1375 = vmatmul.mubr.bf16.gmra.mxu0 %v613
        %v1376 = vpop.f32.mrf.mxu0
        %v1377 = vadd.f32 %v1216, %v1376
        %v1378 = vpop.f32.mrf.mxu0
        %v1379 = vpop.f32.mrf.mxu0
        %v1380 = vadd.f32 %v1219, %v1379
        %v1381 = vpop.f32.mrf.mxu0
        %1382 = vmatprep.mubr.bf16.mxu0 %v621
        %1383 = vmatmul.mubr.bf16.gmra.mxu0 %v620
        %v1384 = vpop.f32.mrf.mxu0
        %v1385 = vadd.f32 %v1224, %v1384
        %v1386 = vpop.f32.mrf.mxu0
        %v1387 = vpop.f32.mrf.mxu0
        %v1388 = vadd.f32 %v1227, %v1387
        %v1389 = vpop.f32.mrf.mxu0
        %1390 = vmatprep.mubr.bf16.mxu0 %v628
        %1391 = vmatmul.mubr.bf16.gmra.mxu0 %v627
        %v1392 = vpop.f32.mrf.mxu0
        %v1393 = vadd.f32 %v1232, %v1392
        %v1394 = vpop.f32.mrf.mxu0
        %v1395 = vpop.f32.mrf.mxu0
        %v1396 = vadd.f32 %v1235, %v1395
        %v1397 = vpop.f32.mrf.mxu0
        %1398 = vmatprep.mubr.bf16.mxu0 %v635
        %1399 = vmatmul.mubr.bf16.gmra.mxu0 %v634
        %v1400 = vpop.f32.mrf.mxu0
        %v1401 = vadd.f32 %v1240, %v1400
        %v1402 = vpop.f32.mrf.mxu0
        %v1403 = vpop.f32.mrf.mxu0
        %v1404 = vadd.f32 %v1243, %v1403
        %v1405 = vpop.f32.mrf.mxu0
        %1406 = vmatprep.mubr.bf16.mxu0 %v642
        %1407 = vmatmul.mubr.bf16.gmra.mxu0 %v641
        %v1408 = vpop.f32.mrf.mxu0
        %v1409 = vadd.f32 %v1248, %v1408
        %v1410 = vpop.f32.mrf.mxu0
        %v1411 = vpop.f32.mrf.mxu0
        %v1412 = vadd.f32 %v1251, %v1411
        %v1413 = vpop.f32.mrf.mxu0
        %1414 = vmatprep.mubr.bf16.mxu0 %v649
        %1415 = vmatmul.mubr.bf16.gmra.mxu0 %v648
        %v1416 = vpop.f32.mrf.mxu0
        %v1417 = vadd.f32 %v1256, %v1416
        %v1418 = vpop.f32.mrf.mxu0
        %v1419 = vpop.f32.mrf.mxu0
        %v1420 = vadd.f32 %v1259, %v1419
        %v1421 = vpop.f32.mrf.mxu0
        %1422 = vdwg.mxu0
        %1423 = vmatprep.subr.bf16.mxu0 0
        %1424 = vmatpush1.bf16.msra.mxu0 %v993
        %1425 = vmatprep.subr.bf16.mxu0 0
        %1426 = vmatpush1.bf16.msra.mxu0 %v992
        %1427 = vmatprep.subr.bf16.mxu0 0
        %1428 = vmatpush1.bf16.msra.mxu0 %v991
        %1429 = vmatprep.subr.bf16.mxu0 0
        %1430 = vmatpush1.bf16.msra.mxu0 %v990
        %1431 = vmatprep.subr.bf16.mxu0 0
        %1432 = vmatpush1.bf16.msra.mxu0 %v989
        %1433 = vmatprep.subr.bf16.mxu0 0
        %1434 = vmatpush1.bf16.msra.mxu0 %v988
        %1435 = vmatprep.subr.bf16.mxu0 0
        %1436 = vmatpush1.bf16.msra.mxu0 %v987
        %1437 = vmatprep.subr.bf16.mxu0 0
        %1438 = vmatpush1.bf16.msra.mxu0 %v986
        %1439 = vmatprep.subr.bf16.mxu0 0
        %1440 = vmatpush2.bf16.msra.mxu0 %v1001
        %1441 = vmatprep.subr.bf16.mxu0 0
        %1442 = vmatpush2.bf16.msra.mxu0 %v1000
        %1443 = vmatprep.subr.bf16.mxu0 0
        %1444 = vmatpush2.bf16.msra.mxu0 %v999
        %1445 = vmatprep.subr.bf16.mxu0 0
        %1446 = vmatpush2.bf16.msra.mxu0 %v998
        %1447 = vmatprep.subr.bf16.mxu0 0
        %1448 = vmatpush2.bf16.msra.mxu0 %v997
        %1449 = vmatprep.subr.bf16.mxu0 0
        %1450 = vmatpush2.bf16.msra.mxu0 %v996
        %1451 = vmatprep.subr.bf16.mxu0 0
        %1452 = vmatpush2.bf16.msra.mxu0 %v995
        %1453 = vmatprep.subr.bf16.mxu0 0
        %1454 = vmatpush2.bf16.msra.mxu0 %v994
        %1455 = vmatprep.mubr.bf16.mxu0 %v546
        %1456 = vmatmul.mubr.bf16.gmra.mxu0 %v545
        %v1457 = vpop.f32.mrf.mxu0
        %v1458 = vadd.f32 %v1297, %v1457
        %v1459 = vpop.f32.mrf.mxu0
        %v1460 = vpop.f32.mrf.mxu0
        %v1461 = vadd.f32 %v1300, %v1460
        %v1462 = vpop.f32.mrf.mxu0
        %1463 = vmatprep.mubr.bf16.mxu0 %v553
        %1464 = vmatmul.mubr.bf16.gmra.mxu0 %v552
        %v1465 = vpop.f32.mrf.mxu0
        %v1466 = vadd.f32 %v1305, %v1465
        %v1467 = vpop.f32.mrf.mxu0
        %v1468 = vpop.f32.mrf.mxu0
        %v1469 = vadd.f32 %v1308, %v1468
        %v1470 = vpop.f32.mrf.mxu0
        %1471 = vmatprep.mubr.bf16.mxu0 %v560
        %1472 = vmatmul.mubr.bf16.gmra.mxu0 %v559
        %v1473 = vpop.f32.mrf.mxu0
        %v1474 = vadd.f32 %v1313, %v1473
        %v1475 = vpop.f32.mrf.mxu0
        %v1476 = vpop.f32.mrf.mxu0
        %v1477 = vadd.f32 %v1316, %v1476
        %v1478 = vpop.f32.mrf.mxu0
        %1479 = vmatprep.mubr.bf16.mxu0 %v567
        %1480 = vmatmul.mubr.bf16.gmra.mxu0 %v566
        %v1481 = vpop.f32.mrf.mxu0
        %v1482 = vadd.f32 %v1321, %v1481
        %v1483 = vpop.f32.mrf.mxu0
        %v1484 = vpop.f32.mrf.mxu0
        %v1485 = vadd.f32 %v1324, %v1484
        %v1486 = vpop.f32.mrf.mxu0
        %1487 = vmatprep.mubr.bf16.mxu0 %v574
        %1488 = vmatmul.mubr.bf16.gmra.mxu0 %v573
        %v1489 = vpop.f32.mrf.mxu0
        %v1490 = vadd.f32 %v1329, %v1489
        %v1491 = vpop.f32.mrf.mxu0
        %v1492 = vpop.f32.mrf.mxu0
        %v1493 = vadd.f32 %v1332, %v1492
        %v1494 = vpop.f32.mrf.mxu0
        %1495 = vmatprep.mubr.bf16.mxu0 %v581
        %1496 = vmatmul.mubr.bf16.gmra.mxu0 %v580
        %v1497 = vpop.f32.mrf.mxu0
        %v1498 = vadd.f32 %v1337, %v1497
        %v1499 = vpop.f32.mrf.mxu0
        %v1500 = vpop.f32.mrf.mxu0
        %v1501 = vadd.f32 %v1340, %v1500
        %v1502 = vpop.f32.mrf.mxu0
        %1503 = vmatprep.mubr.bf16.mxu0 %v588
        %1504 = vmatmul.mubr.bf16.gmra.mxu0 %v587
        %v1505 = vpop.f32.mrf.mxu0
        %v1506 = vadd.f32 %v1345, %v1505
        %v1507 = vpop.f32.mrf.mxu0
        %v1508 = vpop.f32.mrf.mxu0
        %v1509 = vadd.f32 %v1348, %v1508
        %v1510 = vpop.f32.mrf.mxu0
        %1511 = vmatprep.mubr.bf16.mxu0 %v595
        %1512 = vmatmul.mubr.bf16.gmra.mxu0 %v594
        %v1513 = vpop.f32.mrf.mxu0
        %v1514 = vadd.f32 %v1353, %v1513
        %v1515 = vpop.f32.mrf.mxu0
        %v1516 = vpop.f32.mrf.mxu0
        %v1517 = vadd.f32 %v1356, %v1516
        %v1518 = vpop.f32.mrf.mxu0
        %1519 = vmatprep.mubr.bf16.mxu0 %v602
        %1520 = vmatmul.mubr.bf16.gmra.mxu0 %v601
        %v1521 = vpop.f32.mrf.mxu0
        %v1522 = vadd.f32 %v1361, %v1521
        %v1523 = vpop.f32.mrf.mxu0
        %v1524 = vpop.f32.mrf.mxu0
        %v1525 = vadd.f32 %v1364, %v1524
        %v1526 = vpop.f32.mrf.mxu0
        %1527 = vmatprep.mubr.bf16.mxu0 %v609
        %1528 = vmatmul.mubr.bf16.gmra.mxu0 %v608
        %v1529 = vpop.f32.mrf.mxu0
        %v1530 = vadd.f32 %v1369, %v1529
        %v1531 = vpop.f32.mrf.mxu0
        %v1532 = vpop.f32.mrf.mxu0
        %v1533 = vadd.f32 %v1372, %v1532
        %v1534 = vpop.f32.mrf.mxu0
        %1535 = vmatprep.mubr.bf16.mxu0 %v616
        %1536 = vmatmul.mubr.bf16.gmra.mxu0 %v615
        %v1537 = vpop.f32.mrf.mxu0
        %v1538 = vadd.f32 %v1377, %v1537
        %v1539 = vpop.f32.mrf.mxu0
        %v1540 = vpop.f32.mrf.mxu0
        %v1541 = vadd.f32 %v1380, %v1540
        %v1542 = vpop.f32.mrf.mxu0
        %1543 = vmatprep.mubr.bf16.mxu0 %v623
        %1544 = vmatmul.mubr.bf16.gmra.mxu0 %v622
        %v1545 = vpop.f32.mrf.mxu0
        %v1546 = vadd.f32 %v1385, %v1545
        %v1547 = vpop.f32.mrf.mxu0
        %v1548 = vpop.f32.mrf.mxu0
        %v1549 = vadd.f32 %v1388, %v1548
        %v1550 = vpop.f32.mrf.mxu0
        %1551 = vmatprep.mubr.bf16.mxu0 %v630
        %1552 = vmatmul.mubr.bf16.gmra.mxu0 %v629
        %v1553 = vpop.f32.mrf.mxu0
        %v1554 = vadd.f32 %v1393, %v1553
        %v1555 = vpop.f32.mrf.mxu0
        %v1556 = vpop.f32.mrf.mxu0
        %v1557 = vadd.f32 %v1396, %v1556
        %v1558 = vpop.f32.mrf.mxu0
        %1559 = vmatprep.mubr.bf16.mxu0 %v637
        %1560 = vmatmul.mubr.bf16.gmra.mxu0 %v636
        %v1561 = vpop.f32.mrf.mxu0
        %v1562 = vadd.f32 %v1401, %v1561
        %v1563 = vpop.f32.mrf.mxu0
        %v1564 = vpop.f32.mrf.mxu0
        %v1565 = vadd.f32 %v1404, %v1564
        %v1566 = vpop.f32.mrf.mxu0
        %1567 = vmatprep.mubr.bf16.mxu0 %v644
        %1568 = vmatmul.mubr.bf16.gmra.mxu0 %v643
        %v1569 = vpop.f32.mrf.mxu0
        %v1570 = vadd.f32 %v1409, %v1569
        %v1571 = vpop.f32.mrf.mxu0
        %v1572 = vpop.f32.mrf.mxu0
        %v1573 = vadd.f32 %v1412, %v1572
        %v1574 = vpop.f32.mrf.mxu0
        %1575 = vmatprep.mubr.bf16.mxu0 %v651
        %1576 = vmatmul.mubr.bf16.gmra.mxu0 %v650
        %v1577 = vpop.f32.mrf.mxu0
        %v1578 = vadd.f32 %v1417, %v1577
        %v1579 = vpop.f32.mrf.mxu0
        %v1580 = vpop.f32.mrf.mxu0
        %v1581 = vadd.f32 %v1420, %v1580
        %v1582 = vpop.f32.mrf.mxu0
        %1583 = vdwg.mxu0
        %1584 = vmatprep.subr.bf16.mxu0 0
        %1585 = vmatpush1.bf16.msra.mxu0 0
        %1586 = vmatprep.subr.bf16.mxu0 0
        %1587 = vmatpush1.bf16.msra.mxu0 0
        %1588 = vmatprep.subr.bf16.mxu0 0
        %1589 = vmatpush1.bf16.msra.mxu0 0
        %1590 = vmatprep.subr.bf16.mxu0 0
        %1591 = vmatpush1.bf16.msra.mxu0 0
        %1592 = vmatprep.subr.bf16.mxu0 0
        %1593 = vmatpush1.bf16.msra.mxu0 0
        %1594 = vmatprep.subr.bf16.mxu0 0
        %1595 = vmatpush1.bf16.msra.mxu0 0
        %1596 = vmatprep.subr.bf16.mxu0 0
        %1597 = vmatpush1.bf16.msra.mxu0 0
        %1598 = vmatprep.subr.bf16.mxu0 0
        %1599 = vmatpush1.bf16.msra.mxu0 %v1002
        %1600 = vmatprep.subr.bf16.mxu0 0
        %1601 = vmatpush2.bf16.msra.mxu0 0
        %1602 = vmatprep.subr.bf16.mxu0 0
        %1603 = vmatpush2.bf16.msra.mxu0 0
        %1604 = vmatprep.subr.bf16.mxu0 0
        %1605 = vmatpush2.bf16.msra.mxu0 0
        %1606 = vmatprep.subr.bf16.mxu0 0
        %1607 = vmatpush2.bf16.msra.mxu0 0
        %1608 = vmatprep.subr.bf16.mxu0 0
        %1609 = vmatpush2.bf16.msra.mxu0 0
        %1610 = vmatprep.subr.bf16.mxu0 0
        %1611 = vmatpush2.bf16.msra.mxu0 0
        %1612 = vmatprep.subr.bf16.mxu0 0
        %1613 = vmatpush2.bf16.msra.mxu0 0
        %1614 = vmatprep.subr.bf16.mxu0 0
        %1615 = vmatpush2.bf16.msra.mxu0 0
        %1616 = vmatprep.mubr.bf16.mxu0 0
        %1617 = vmatmul.mubr.bf16.gmra.mxu0 %v1054
        %v1618 = vpop.f32.mrf.mxu0
        %v1619 = vadd.f32 %v1458, %v1618
        %v1620 = vpop.f32.mrf.mxu0
        %v1621 = vpop.f32.mrf.mxu0
        %v1622 = vadd.f32 %v1461, %v1621
        %v1623 = vpop.f32.mrf.mxu0
        %1624 = vmatprep.mubr.bf16.mxu0 0
        %1625 = vmatmul.mubr.bf16.gmra.mxu0 %v1057
        %v1626 = vpop.f32.mrf.mxu0
        %v1627 = vadd.f32 %v1466, %v1626
        %v1628 = vpop.f32.mrf.mxu0
        %v1629 = vpop.f32.mrf.mxu0
        %v1630 = vadd.f32 %v1469, %v1629
        %v1631 = vpop.f32.mrf.mxu0
        %1632 = vmatprep.mubr.bf16.mxu0 0
        %1633 = vmatmul.mubr.bf16.gmra.mxu0 %v1060
        %v1634 = vpop.f32.mrf.mxu0
        %v1635 = vadd.f32 %v1474, %v1634
        %v1636 = vpop.f32.mrf.mxu0
        %v1637 = vpop.f32.mrf.mxu0
        %v1638 = vadd.f32 %v1477, %v1637
        %v1639 = vpop.f32.mrf.mxu0
        %1640 = vmatprep.mubr.bf16.mxu0 0
        %1641 = vmatmul.mubr.bf16.gmra.mxu0 %v1063
        %v1642 = vpop.f32.mrf.mxu0
        %v1643 = vadd.f32 %v1482, %v1642
        %v1644 = vpop.f32.mrf.mxu0
        %v1645 = vpop.f32.mrf.mxu0
        %v1646 = vadd.f32 %v1485, %v1645
        %v1647 = vpop.f32.mrf.mxu0
        %1648 = vmatprep.mubr.bf16.mxu0 0
        %1649 = vmatmul.mubr.bf16.gmra.mxu0 %v1066
        %v1650 = vpop.f32.mrf.mxu0
        %v1651 = vadd.f32 %v1490, %v1650
        %v1652 = vpop.f32.mrf.mxu0
        %v1653 = vpop.f32.mrf.mxu0
        %v1654 = vadd.f32 %v1493, %v1653
        %v1655 = vpop.f32.mrf.mxu0
        %1656 = vmatprep.mubr.bf16.mxu0 0
        %1657 = vmatmul.mubr.bf16.gmra.mxu0 %v1069
        %v1658 = vpop.f32.mrf.mxu0
        %v1659 = vadd.f32 %v1498, %v1658
        %v1660 = vpop.f32.mrf.mxu0
        %v1661 = vpop.f32.mrf.mxu0
        %v1662 = vadd.f32 %v1501, %v1661
        %v1663 = vpop.f32.mrf.mxu0
        %1664 = vmatprep.mubr.bf16.mxu0 0
        %1665 = vmatmul.mubr.bf16.gmra.mxu0 %v1072
        %v1666 = vpop.f32.mrf.mxu0
        %v1667 = vadd.f32 %v1506, %v1666
        %v1668 = vpop.f32.mrf.mxu0
        %v1669 = vpop.f32.mrf.mxu0
        %v1670 = vadd.f32 %v1509, %v1669
        %v1671 = vpop.f32.mrf.mxu0
        %1672 = vmatprep.mubr.bf16.mxu0 0
        %1673 = vmatmul.mubr.bf16.gmra.mxu0 %v1075
        %v1674 = vpop.f32.mrf.mxu0
        %v1675 = vadd.f32 %v1514, %v1674
        %v1676 = vpop.f32.mrf.mxu0
        %v1677 = vpop.f32.mrf.mxu0
        %v1678 = vadd.f32 %v1517, %v1677
        %v1679 = vpop.f32.mrf.mxu0
        %1680 = vmatprep.mubr.bf16.mxu0 0
        %1681 = vmatmul.mubr.bf16.gmra.mxu0 %v1078
        %v1682 = vpop.f32.mrf.mxu0
        %v1683 = vadd.f32 %v1522, %v1682
        %v1684 = vpop.f32.mrf.mxu0
        %v1685 = vpop.f32.mrf.mxu0
        %v1686 = vadd.f32 %v1525, %v1685
        %v1687 = vpop.f32.mrf.mxu0
        %1688 = vmatprep.mubr.bf16.mxu0 0
        %1689 = vmatmul.mubr.bf16.gmra.mxu0 %v1081
        %v1690 = vpop.f32.mrf.mxu0
        %v1691 = vadd.f32 %v1530, %v1690
        %v1692 = vpop.f32.mrf.mxu0
        %v1693 = vpop.f32.mrf.mxu0
        %v1694 = vadd.f32 %v1533, %v1693
        %v1695 = vpop.f32.mrf.mxu0
        %1696 = vmatprep.mubr.bf16.mxu0 0
        %1697 = vmatmul.mubr.bf16.gmra.mxu0 %v1084
        %v1698 = vpop.f32.mrf.mxu0
        %v1699 = vadd.f32 %v1538, %v1698
        %v1700 = vpop.f32.mrf.mxu0
        %v1701 = vpop.f32.mrf.mxu0
        %v1702 = vadd.f32 %v1541, %v1701
        %v1703 = vpop.f32.mrf.mxu0
        %1704 = vmatprep.mubr.bf16.mxu0 0
        %1705 = vmatmul.mubr.bf16.gmra.mxu0 %v1087
        %v1706 = vpop.f32.mrf.mxu0
        %v1707 = vadd.f32 %v1546, %v1706
        %v1708 = vpop.f32.mrf.mxu0
        %v1709 = vpop.f32.mrf.mxu0
        %v1710 = vadd.f32 %v1549, %v1709
        %v1711 = vpop.f32.mrf.mxu0
        %1712 = vmatprep.mubr.bf16.mxu0 0
        %1713 = vmatmul.mubr.bf16.gmra.mxu0 %v1090
        %v1714 = vpop.f32.mrf.mxu0
        %v1715 = vadd.f32 %v1554, %v1714
        %v1716 = vpop.f32.mrf.mxu0
        %v1717 = vpop.f32.mrf.mxu0
        %v1718 = vadd.f32 %v1557, %v1717
        %v1719 = vpop.f32.mrf.mxu0
        %1720 = vmatprep.mubr.bf16.mxu0 0
        %1721 = vmatmul.mubr.bf16.gmra.mxu0 %v1093
        %v1722 = vpop.f32.mrf.mxu0
        %v1723 = vadd.f32 %v1562, %v1722
        %v1724 = vpop.f32.mrf.mxu0
        %v1725 = vpop.f32.mrf.mxu0
        %v1726 = vadd.f32 %v1565, %v1725
        %v1727 = vpop.f32.mrf.mxu0
        %1728 = vmatprep.mubr.bf16.mxu0 0
        %1729 = vmatmul.mubr.bf16.gmra.mxu0 %v1096
        %v1730 = vpop.f32.mrf.mxu0
        %v1731 = vadd.f32 %v1570, %v1730
        %v1732 = vpop.f32.mrf.mxu0
        %v1733 = vpop.f32.mrf.mxu0
        %v1734 = vadd.f32 %v1573, %v1733
        %v1735 = vpop.f32.mrf.mxu0
        %1736 = vmatprep.mubr.bf16.mxu0 0
        %1737 = vmatmul.mubr.bf16.gmra.mxu0 %v1099
        %v1738 = vpop.f32.mrf.mxu0
        %v1739 = vadd.f32 %v1578, %v1738
        %v1740 = vpop.f32.mrf.mxu0
        %v1741 = vpop.f32.mrf.mxu0
        %v1742 = vadd.f32 %v1581, %v1741
        %v1743 = vpop.f32.mrf.mxu0
        %1744 = vdwg.mxu0
        %v1745 = vsub.f32 0.0, %v1619
        %v1746 = vsub.f32 0.0, %v1622
        %v1747 = vsub.f32 0.0, %v1627
        %v1748 = vsub.f32 0.0, %v1630
        %v1749 = vsub.f32 0.0, %v1635
        %v1750 = vsub.f32 0.0, %v1638
        %v1751 = vsub.f32 0.0, %v1643
        %v1752 = vsub.f32 0.0, %v1646
        %v1753 = vsub.f32 0.0, %v1651
        %v1754 = vsub.f32 0.0, %v1654
        %v1755 = vsub.f32 0.0, %v1659
        %v1756 = vsub.f32 0.0, %v1662
        %v1757 = vsub.f32 0.0, %v1667
        %v1758 = vsub.f32 0.0, %v1670
        %v1759 = vsub.f32 0.0, %v1675
        %v1760 = vsub.f32 0.0, %v1678
        %v1761 = vsub.f32 0.0, %v1683
        %v1762 = vsub.f32 0.0, %v1686
        %v1763 = vsub.f32 0.0, %v1691
        %v1764 = vsub.f32 0.0, %v1694
        %v1765 = vsub.f32 0.0, %v1699
        %v1766 = vsub.f32 0.0, %v1702
        %v1767 = vsub.f32 0.0, %v1707
        %v1768 = vsub.f32 0.0, %v1710
        %v1769 = vsub.f32 0.0, %v1715
        %v1770 = vsub.f32 0.0, %v1718
        %v1771 = vsub.f32 0.0, %v1723
        %v1772 = vsub.f32 0.0, %v1726
        %v1773 = vsub.f32 0.0, %v1731
        %v1774 = vsub.f32 0.0, %v1734
        %v1775 = vsub.f32 0.0, %v1739
        %v1776 = vsub.f32 0.0, %v1742
        %v1777 = vmul.f32 %v1745, 1.442695
        %v1778 = vpow.pop %v1777
        %v1779 = vmul.f32 %v1746, 1.442695
        %v1780 = vpow.pop %v1779
        %v1781 = vmul.f32 %v1747, 1.442695
        %v1782 = vpow.pop %v1781
        %v1783 = vmul.f32 %v1748, 1.442695
        %v1784 = vpow.pop %v1783
        %v1785 = vmul.f32 %v1749, 1.442695
        %v1786 = vpow.pop %v1785
        %v1787 = vmul.f32 %v1750, 1.442695
        %v1788 = vpow.pop %v1787
        %v1789 = vmul.f32 %v1751, 1.442695
        %v1790 = vpow.pop %v1789
        %v1791 = vmul.f32 %v1752, 1.442695
        %v1792 = vpow.pop %v1791
        %v1793 = vmul.f32 %v1753, 1.442695
        %v1794 = vpow.pop %v1793
        %v1795 = vmul.f32 %v1754, 1.442695
        %v1796 = vpow.pop %v1795
        %v1797 = vmul.f32 %v1755, 1.442695
        %v1798 = vpow.pop %v1797
        %v1799 = vmul.f32 %v1756, 1.442695
        %v1800 = vpow.pop %v1799
        %v1801 = vmul.f32 %v1757, 1.442695
        %v1802 = vpow.pop %v1801
        %v1803 = vmul.f32 %v1758, 1.442695
        %v1804 = vpow.pop %v1803
        %v1805 = vmul.f32 %v1759, 1.442695
        %v1806 = vpow.pop %v1805
        %v1807 = vmul.f32 %v1760, 1.442695
        %v1808 = vpow.pop %v1807
        %v1809 = vmul.f32 %v1761, 1.442695
        %v1810 = vpow.pop %v1809
        %v1811 = vmul.f32 %v1762, 1.442695
        %v1812 = vpow.pop %v1811
        %v1813 = vmul.f32 %v1763, 1.442695
        %v1814 = vpow.pop %v1813
        %v1815 = vmul.f32 %v1764, 1.442695
        %v1816 = vpow.pop %v1815
        %v1817 = vmul.f32 %v1765, 1.442695
        %v1818 = vpow.pop %v1817
        %v1819 = vmul.f32 %v1766, 1.442695
        %v1820 = vpow.pop %v1819
        %v1821 = vmul.f32 %v1767, 1.442695
        %v1822 = vpow.pop %v1821
        %v1823 = vmul.f32 %v1768, 1.442695
        %v1824 = vpow.pop %v1823
        %v1825 = vmul.f32 %v1769, 1.442695
        %v1826 = vpow.pop %v1825
        %v1827 = vmul.f32 %v1770, 1.442695
        %v1828 = vpow.pop %v1827
        %v1829 = vmul.f32 %v1771, 1.442695
        %v1830 = vpow.pop %v1829
        %v1831 = vmul.f32 %v1772, 1.442695
        %v1832 = vpow.pop %v1831
        %v1833 = vmul.f32 %v1773, 1.442695
        %v1834 = vpow.pop %v1833
        %v1835 = vmul.f32 %v1774, 1.442695
        %v1836 = vpow.pop %v1835
        %v1837 = vmul.f32 %v1775, 1.442695
        %v1838 = vpow.pop %v1837
        %v1839 = vmul.f32 %v1776, 1.442695
        %v1840 = vpow.pop %v1839
        %v1841 = vadd.f32 %v1778, 1.0
        %v1842 = vadd.f32 %v1780, 1.0
        %v1843 = vadd.f32 %v1782, 1.0
        %v1844 = vadd.f32 %v1784, 1.0
        %v1845 = vadd.f32 %v1786, 1.0
        %v1846 = vadd.f32 %v1788, 1.0
        %v1847 = vadd.f32 %v1790, 1.0
        %v1848 = vadd.f32 %v1792, 1.0
        %v1849 = vadd.f32 %v1794, 1.0
        %v1850 = vadd.f32 %v1796, 1.0
        %v1851 = vadd.f32 %v1798, 1.0
        %v1852 = vadd.f32 %v1800, 1.0
        %v1853 = vadd.f32 %v1802, 1.0
        %v1854 = vadd.f32 %v1804, 1.0
        %v1855 = vadd.f32 %v1806, 1.0
        %v1856 = vadd.f32 %v1808, 1.0
        %v1857 = vadd.f32 %v1810, 1.0
        %v1858 = vadd.f32 %v1812, 1.0
        %v1859 = vadd.f32 %v1814, 1.0
        %v1860 = vadd.f32 %v1816, 1.0
        %v1861 = vadd.f32 %v1818, 1.0
        %v1862 = vadd.f32 %v1820, 1.0
        %v1863 = vadd.f32 %v1822, 1.0
        %v1864 = vadd.f32 %v1824, 1.0
        %v1865 = vadd.f32 %v1826, 1.0
        %v1866 = vadd.f32 %v1828, 1.0
        %v1867 = vadd.f32 %v1830, 1.0
        %v1868 = vadd.f32 %v1832, 1.0
        %v1869 = vadd.f32 %v1834, 1.0
        %v1870 = vadd.f32 %v1836, 1.0
        %v1871 = vadd.f32 %v1838, 1.0
        %v1872 = vadd.f32 %v1840, 1.0
        %v1873 = vrcp.pop %v1841
        %v1874 = vrcp.pop %v1842
        %v1875 = vrcp.pop %v1843
        %v1876 = vrcp.pop %v1844
        %v1877 = vrcp.pop %v1845
        %v1878 = vrcp.pop %v1846
        %v1879 = vrcp.pop %v1847
        %v1880 = vrcp.pop %v1848
        %v1881 = vrcp.pop %v1849
        %v1882 = vrcp.pop %v1850
        %v1883 = vrcp.pop %v1851
        %v1884 = vrcp.pop %v1852
        %v1885 = vrcp.pop %v1853
        %v1886 = vrcp.pop %v1854
        %v1887 = vrcp.pop %v1855
        %v1888 = vrcp.pop %v1856
        %v1889 = vrcp.pop %v1857
        %v1890 = vrcp.pop %v1858
        %v1891 = vrcp.pop %v1859
        %v1892 = vrcp.pop %v1860
        %v1893 = vrcp.pop %v1861
        %v1894 = vrcp.pop %v1862
        %v1895 = vrcp.pop %v1863
        %v1896 = vrcp.pop %v1864
        %v1897 = vrcp.pop %v1865
        %v1898 = vrcp.pop %v1866
        %v1899 = vrcp.pop %v1867
        %v1900 = vrcp.pop %v1868
        %v1901 = vrcp.pop %v1869
        %v1902 = vrcp.pop %v1870
        %v1903 = vrcp.pop %v1871
        %v1904 = vrcp.pop %v1872
        %v1905 = vpack.c.bf16 %v1874, %v1873
        %v1906 = vpack.c.bf16 %v1876, %v1875
        %v1907 = vpack.c.bf16 %v1878, %v1877
        %v1908 = vpack.c.bf16 %v1880, %v1879
        %v1909 = vpack.c.bf16 %v1882, %v1881
        %v1910 = vpack.c.bf16 %v1884, %v1883
        %v1911 = vpack.c.bf16 %v1886, %v1885
        %v1912 = vpack.c.bf16 %v1888, %v1887
        %v1913 = vpack.c.bf16 %v1890, %v1889
        %v1914 = vpack.c.bf16 %v1892, %v1891
        %v1915 = vpack.c.bf16 %v1894, %v1893
        %v1916 = vpack.c.bf16 %v1896, %v1895
        %v1917 = vpack.c.bf16 %v1898, %v1897
        %v1918 = vpack.c.bf16 %v1900, %v1899
        %v1919 = vpack.c.bf16 %v1902, %v1901
        %v1920 = vpack.c.bf16 %v1904, %v1903
        %v1921 = vld [vmem:[#allocation8] sm:$0xf]
        %v1922 = vld [vmem:[#allocation8 + $0x4] sm:$0xf]
        %v1923 = vld [vmem:[#allocation8 + $0x8] sm:$0xf]
        %v1924 = vld [vmem:[#allocation8 + $0xc] sm:$0xf]
        %v1925 = vld [vmem:[#allocation8 + $0x10] sm:$0xf]
        %v1926 = vld [vmem:[#allocation8 + $0x14] sm:$0xf]
        %v1927 = vld [vmem:[#allocation8 + $0x18] sm:$0xf]
        %v1928 = vld [vmem:[#allocation8 + $0x1c] sm:$0xf]
        %v1929 = vld [vmem:[#allocation8 + $0x20] sm:$0xf]
        %v1930 = vld [vmem:[#allocation8 + $0x24] sm:$0xf]
        %v1931 = vld [vmem:[#allocation8 + $0x28] sm:$0xf]
        %v1932 = vld [vmem:[#allocation8 + $0x2c] sm:$0xf]
        %v1933 = vld [vmem:[#allocation8 + $0x30] sm:$0xf]
        %v1934 = vld [vmem:[#allocation8 + $0x34] sm:$0xf]
        %v1935 = vld [vmem:[#allocation8 + $0x38] sm:$0xf]
        %v1936 = vld [vmem:[#allocation8 + $0x3c] sm:$0xf]
        %v1937 = vld [vmem:[#allocation10] sm:$0x1]
        %v1939 = vlaneseq
        %v1940 = vshrl.u32 %v1939, 7
        %v1941 = vsub.s32 0, %v1940
        %v1942 = vrot.slane %v1937, %v1941
        %v1960 = vunpack.c.l.b16 %v1921
        %v1961 = vunpack.c.l.b16 %v1922
        %v1962 = vunpack.c.l.b16 %v1923
        %v1963 = vunpack.c.l.b16 %v1924
        %v1964 = vunpack.c.l.b16 %v1925
        %v1965 = vunpack.c.l.b16 %v1926
        %v1966 = vunpack.c.l.b16 %v1927
        %v1967 = vunpack.c.l.b16 %v1928
        %v1968 = vunpack.c.l.b16 %v1929
        %v1969 = vunpack.c.l.b16 %v1930
        %v1970 = vunpack.c.l.b16 %v1931
        %v1971 = vunpack.c.l.b16 %v1932
        %v1972 = vunpack.c.l.b16 %v1933
        %v1973 = vunpack.c.l.b16 %v1934
        %v1974 = vunpack.c.l.b16 %v1935
        %v1975 = vunpack.c.l.b16 %v1936
        %v1976 = vpack.c.b16 %v1961, %v1960
        %v1977 = vpack.c.b16 %v1963, %v1962
        %v1978 = vpack.c.b16 %v1965, %v1964
        %v1979 = vpack.c.b16 %v1967, %v1966
        %v1980 = vpack.c.b16 %v1969, %v1968
        %v1981 = vpack.c.b16 %v1971, %v1970
        %v1982 = vpack.c.b16 %v1973, %v1972
        %v1983 = vpack.c.b16 %v1975, %v1974
        %1992 = vmatprep.subr.bf16.mxu0 0
        %1993 = vmatpush1.bf16.msra.mxu0 %v1983
        %1994 = vmatprep.subr.bf16.mxu0 0
        %1995 = vmatpush1.bf16.msra.mxu0 %v1982
        %1996 = vmatprep.subr.bf16.mxu0 0
        %1997 = vmatpush1.bf16.msra.mxu0 %v1981
        %1998 = vmatprep.subr.bf16.mxu0 0
        %1999 = vmatpush1.bf16.msra.mxu0 %v1980
        %2000 = vmatprep.subr.bf16.mxu0 0
        %2001 = vmatpush1.bf16.msra.mxu0 %v1979
        %2002 = vmatprep.subr.bf16.mxu0 0
        %2003 = vmatpush1.bf16.msra.mxu0 %v1978
        %2004 = vmatprep.subr.bf16.mxu0 0
        %2005 = vmatpush1.bf16.msra.mxu0 %v1977
        %2006 = vmatprep.subr.bf16.mxu0 0
        %2007 = vmatpush1.bf16.msra.mxu0 %v1976
        %2008 = vmatprep.subr.bf16.mxu0 0
        %2009 = vmatpush2.bf16.msra.mxu0 0
        %2010 = vmatprep.subr.bf16.mxu0 0
        %2011 = vmatpush2.bf16.msra.mxu0 0
        %2012 = vmatprep.subr.bf16.mxu0 0
        %2013 = vmatpush2.bf16.msra.mxu0 0
        %2014 = vmatprep.subr.bf16.mxu0 0
        %2015 = vmatpush2.bf16.msra.mxu0 0
        %2016 = vmatprep.subr.bf16.mxu0 0
        %2017 = vmatpush2.bf16.msra.mxu0 0
        %2018 = vmatprep.subr.bf16.mxu0 0
        %2019 = vmatpush2.bf16.msra.mxu0 0
        %2020 = vmatprep.subr.bf16.mxu0 0
        %2021 = vmatpush2.bf16.msra.mxu0 0
        %2022 = vmatprep.subr.bf16.mxu0 0
        %2023 = vmatpush2.bf16.msra.mxu0 0
        %2024 = vmatprep.mubr.bf16.mxu0 0
        %2025 = vmatmul.mubr.bf16.gmra.mxu0 %v1905
        %v2026 = vpop.f32.mrf.mxu0
        %v2027 = vadd.f32 %v1942, %v2026
        %v2028 = vpop.f32.mrf.mxu0
        %v2029 = vpop.f32.mrf.mxu0
        %v2030 = vadd.f32 %v1942, %v2029
        %v2031 = vpop.f32.mrf.mxu0
        %2032 = vmatprep.mubr.bf16.mxu0 0
        %2033 = vmatmul.mubr.bf16.gmra.mxu0 %v1906
        %v2034 = vpop.f32.mrf.mxu0
        %v2035 = vadd.f32 %v1942, %v2034
        %v2036 = vpop.f32.mrf.mxu0
        %v2037 = vpop.f32.mrf.mxu0
        %v2038 = vadd.f32 %v1942, %v2037
        %v2039 = vpop.f32.mrf.mxu0
        %2040 = vmatprep.mubr.bf16.mxu0 0
        %2041 = vmatmul.mubr.bf16.gmra.mxu0 %v1907
        %v2042 = vpop.f32.mrf.mxu0
        %v2043 = vadd.f32 %v1942, %v2042
        %v2044 = vpop.f32.mrf.mxu0
        %v2045 = vpop.f32.mrf.mxu0
        %v2046 = vadd.f32 %v1942, %v2045
        %v2047 = vpop.f32.mrf.mxu0
        %2048 = vmatprep.mubr.bf16.mxu0 0
        %2049 = vmatmul.mubr.bf16.gmra.mxu0 %v1908
        %v2050 = vpop.f32.mrf.mxu0
        %v2051 = vadd.f32 %v1942, %v2050
        %v2052 = vpop.f32.mrf.mxu0
        %v2053 = vpop.f32.mrf.mxu0
        %v2054 = vadd.f32 %v1942, %v2053
        %v2055 = vpop.f32.mrf.mxu0
        %2056 = vmatprep.mubr.bf16.mxu0 0
        %2057 = vmatmul.mubr.bf16.gmra.mxu0 %v1909
        %v2058 = vpop.f32.mrf.mxu0
        %v2059 = vadd.f32 %v1942, %v2058
        %v2060 = vpop.f32.mrf.mxu0
        %v2061 = vpop.f32.mrf.mxu0
        %v2062 = vadd.f32 %v1942, %v2061
        %v2063 = vpop.f32.mrf.mxu0
        %2064 = vmatprep.mubr.bf16.mxu0 0
        %2065 = vmatmul.mubr.bf16.gmra.mxu0 %v1910
        %v2066 = vpop.f32.mrf.mxu0
        %v2067 = vadd.f32 %v1942, %v2066
        %v2068 = vpop.f32.mrf.mxu0
        %v2069 = vpop.f32.mrf.mxu0
        %v2070 = vadd.f32 %v1942, %v2069
        %v2071 = vpop.f32.mrf.mxu0
        %2072 = vmatprep.mubr.bf16.mxu0 0
        %2073 = vmatmul.mubr.bf16.gmra.mxu0 %v1911
        %v2074 = vpop.f32.mrf.mxu0
        %v2075 = vadd.f32 %v1942, %v2074
        %v2076 = vpop.f32.mrf.mxu0
        %v2077 = vpop.f32.mrf.mxu0
        %v2078 = vadd.f32 %v1942, %v2077
        %v2079 = vpop.f32.mrf.mxu0
        %2080 = vmatprep.mubr.bf16.mxu0 0
        %2081 = vmatmul.mubr.bf16.gmra.mxu0 %v1912
        %v2082 = vpop.f32.mrf.mxu0
        %v2083 = vadd.f32 %v1942, %v2082
        %v2084 = vpop.f32.mrf.mxu0
        %v2085 = vpop.f32.mrf.mxu0
        %v2086 = vadd.f32 %v1942, %v2085
        %v2087 = vpop.f32.mrf.mxu0
        %2088 = vmatprep.mubr.bf16.mxu0 0
        %2089 = vmatmul.mubr.bf16.gmra.mxu0 %v1913
        %v2090 = vpop.f32.mrf.mxu0
        %v2091 = vadd.f32 %v1942, %v2090
        %v2092 = vpop.f32.mrf.mxu0
        %v2093 = vpop.f32.mrf.mxu0
        %v2094 = vadd.f32 %v1942, %v2093
        %v2095 = vpop.f32.mrf.mxu0
        %2096 = vmatprep.mubr.bf16.mxu0 0
        %2097 = vmatmul.mubr.bf16.gmra.mxu0 %v1914
        %v2098 = vpop.f32.mrf.mxu0
        %v2099 = vadd.f32 %v1942, %v2098
        %v2100 = vpop.f32.mrf.mxu0
        %v2101 = vpop.f32.mrf.mxu0
        %v2102 = vadd.f32 %v1942, %v2101
        %v2103 = vpop.f32.mrf.mxu0
        %2104 = vmatprep.mubr.bf16.mxu0 0
        %2105 = vmatmul.mubr.bf16.gmra.mxu0 %v1915
        %v2106 = vpop.f32.mrf.mxu0
        %v2107 = vadd.f32 %v1942, %v2106
        %v2108 = vpop.f32.mrf.mxu0
        %v2109 = vpop.f32.mrf.mxu0
        %v2110 = vadd.f32 %v1942, %v2109
        %v2111 = vpop.f32.mrf.mxu0
        %2112 = vmatprep.mubr.bf16.mxu0 0
        %2113 = vmatmul.mubr.bf16.gmra.mxu0 %v1916
        %v2114 = vpop.f32.mrf.mxu0
        %v2115 = vadd.f32 %v1942, %v2114
        %v2116 = vpop.f32.mrf.mxu0
        %v2117 = vpop.f32.mrf.mxu0
        %v2118 = vadd.f32 %v1942, %v2117
        %v2119 = vpop.f32.mrf.mxu0
        %2120 = vmatprep.mubr.bf16.mxu0 0
        %2121 = vmatmul.mubr.bf16.gmra.mxu0 %v1917
        %v2122 = vpop.f32.mrf.mxu0
        %v2123 = vadd.f32 %v1942, %v2122
        %v2124 = vpop.f32.mrf.mxu0
        %v2125 = vpop.f32.mrf.mxu0
        %v2126 = vadd.f32 %v1942, %v2125
        %v2127 = vpop.f32.mrf.mxu0
        %2128 = vmatprep.mubr.bf16.mxu0 0
        %2129 = vmatmul.mubr.bf16.gmra.mxu0 %v1918
        %v2130 = vpop.f32.mrf.mxu0
        %v2131 = vadd.f32 %v1942, %v2130
        %v2132 = vpop.f32.mrf.mxu0
        %v2133 = vpop.f32.mrf.mxu0
        %v2134 = vadd.f32 %v1942, %v2133
        %v2135 = vpop.f32.mrf.mxu0
        %2136 = vmatprep.mubr.bf16.mxu0 0
        %2137 = vmatmul.mubr.bf16.gmra.mxu0 %v1919
        %v2138 = vpop.f32.mrf.mxu0
        %v2139 = vadd.f32 %v1942, %v2138
        %v2140 = vpop.f32.mrf.mxu0
        %v2141 = vpop.f32.mrf.mxu0
        %v2142 = vadd.f32 %v1942, %v2141
        %v2143 = vpop.f32.mrf.mxu0
        %2144 = vmatprep.mubr.bf16.mxu0 0
        %2145 = vmatmul.mubr.bf16.gmra.mxu0 %v1920
        %v2146 = vpop.f32.mrf.mxu0
        %v2147 = vadd.f32 %v1942, %v2146
        %v2148 = vpop.f32.mrf.mxu0
        %v2149 = vpop.f32.mrf.mxu0
        %v2150 = vadd.f32 %v1942, %v2149
        %v2151 = vpop.f32.mrf.mxu0
        %2152 = vdwg.mxu0
        %2153 = vmax.xlane.f32.xlu0 %v2027
        %v2154 = vpop.xlane.xlu0 %2153
        %2155 = vmax.xlane.f32.xlu0 %v2030
        %v2156 = vpop.xlane.xlu0 %2155
        %2157 = vmax.xlane.f32.xlu0 %v2035
        %v2158 = vpop.xlane.xlu0 %2157
        %2159 = vmax.xlane.f32.xlu0 %v2038
        %v2160 = vpop.xlane.xlu0 %2159
        %2161 = vmax.xlane.f32.xlu0 %v2043
        %v2162 = vpop.xlane.xlu0 %2161
        %2163 = vmax.xlane.f32.xlu0 %v2046
        %v2164 = vpop.xlane.xlu0 %2163
        %2165 = vmax.xlane.f32.xlu0 %v2051
        %v2166 = vpop.xlane.xlu0 %2165
        %2167 = vmax.xlane.f32.xlu0 %v2054
        %v2168 = vpop.xlane.xlu0 %2167
        %2169 = vmax.xlane.f32.xlu0 %v2059
        %v2170 = vpop.xlane.xlu0 %2169
        %2171 = vmax.xlane.f32.xlu0 %v2062
        %v2172 = vpop.xlane.xlu0 %2171
        %2173 = vmax.xlane.f32.xlu0 %v2067
        %v2174 = vpop.xlane.xlu0 %2173
        %2175 = vmax.xlane.f32.xlu0 %v2070
        %v2176 = vpop.xlane.xlu0 %2175
        %2177 = vmax.xlane.f32.xlu0 %v2075
        %v2178 = vpop.xlane.xlu0 %2177
        %2179 = vmax.xlane.f32.xlu0 %v2078
        %v2180 = vpop.xlane.xlu0 %2179
        %2181 = vmax.xlane.f32.xlu0 %v2083
        %v2182 = vpop.xlane.xlu0 %2181
        %2183 = vmax.xlane.f32.xlu0 %v2086
        %v2184 = vpop.xlane.xlu0 %2183
        %2185 = vmax.xlane.f32.xlu0 %v2091
        %v2186 = vpop.xlane.xlu0 %2185
        %2187 = vmax.xlane.f32.xlu0 %v2094
        %v2188 = vpop.xlane.xlu0 %2187
        %2189 = vmax.xlane.f32.xlu0 %v2099
        %v2190 = vpop.xlane.xlu0 %2189
        %2191 = vmax.xlane.f32.xlu0 %v2102
        %v2192 = vpop.xlane.xlu0 %2191
        %2193 = vmax.xlane.f32.xlu0 %v2107
        %v2194 = vpop.xlane.xlu0 %2193
        %2195 = vmax.xlane.f32.xlu0 %v2110
        %v2196 = vpop.xlane.xlu0 %2195
        %2197 = vmax.xlane.f32.xlu0 %v2115
        %v2198 = vpop.xlane.xlu0 %2197
        %2199 = vmax.xlane.f32.xlu0 %v2118
        %v2200 = vpop.xlane.xlu0 %2199
        %2201 = vmax.xlane.f32.xlu0 %v2123
        %v2202 = vpop.xlane.xlu0 %2201
        %2203 = vmax.xlane.f32.xlu0 %v2126
        %v2204 = vpop.xlane.xlu0 %2203
        %2205 = vmax.xlane.f32.xlu0 %v2131
        %v2206 = vpop.xlane.xlu0 %2205
        %2207 = vmax.xlane.f32.xlu0 %v2134
        %v2208 = vpop.xlane.xlu0 %2207
        %2209 = vmax.xlane.f32.xlu0 %v2139
        %v2210 = vpop.xlane.xlu0 %2209
        %2211 = vmax.xlane.f32.xlu0 %v2142
        %v2212 = vpop.xlane.xlu0 %2211
        %2213 = vmax.xlane.f32.xlu0 %v2147
        %v2214 = vpop.xlane.xlu0 %2213
        %2215 = vmax.xlane.f32.xlu0 %v2150
        %v2216 = vpop.xlane.xlu0 %2215
        %v2217 = vsub.f32 %v2027, %v2154
        %v2218 = vsub.f32 %v2030, %v2156
        %v2219 = vsub.f32 %v2035, %v2158
        %v2220 = vsub.f32 %v2038, %v2160
        %v2221 = vsub.f32 %v2043, %v2162
        %v2222 = vsub.f32 %v2046, %v2164
        %v2223 = vsub.f32 %v2051, %v2166
        %v2224 = vsub.f32 %v2054, %v2168
        %v2225 = vsub.f32 %v2059, %v2170
        %v2226 = vsub.f32 %v2062, %v2172
        %v2227 = vsub.f32 %v2067, %v2174
        %v2228 = vsub.f32 %v2070, %v2176
        %v2229 = vsub.f32 %v2075, %v2178
        %v2230 = vsub.f32 %v2078, %v2180
        %v2231 = vsub.f32 %v2083, %v2182
        %v2232 = vsub.f32 %v2086, %v2184
        %v2233 = vsub.f32 %v2091, %v2186
        %v2234 = vsub.f32 %v2094, %v2188
        %v2235 = vsub.f32 %v2099, %v2190
        %v2236 = vsub.f32 %v2102, %v2192
        %v2237 = vsub.f32 %v2107, %v2194
        %v2238 = vsub.f32 %v2110, %v2196
        %v2239 = vsub.f32 %v2115, %v2198
        %v2240 = vsub.f32 %v2118, %v2200
        %v2241 = vsub.f32 %v2123, %v2202
        %v2242 = vsub.f32 %v2126, %v2204
        %v2243 = vsub.f32 %v2131, %v2206
        %v2244 = vsub.f32 %v2134, %v2208
        %v2245 = vsub.f32 %v2139, %v2210
        %v2246 = vsub.f32 %v2142, %v2212
        %v2247 = vsub.f32 %v2147, %v2214
        %v2248 = vsub.f32 %v2150, %v2216
        %v2249 = vmul.f32 %v2217, 1.442695
        %v2250 = vpow.pop %v2249
        %v2251 = vmul.f32 %v2218, 1.442695
        %v2252 = vpow.pop %v2251
        %v2253 = vmul.f32 %v2219, 1.442695
        %v2254 = vpow.pop %v2253
        %v2255 = vmul.f32 %v2220, 1.442695
        %v2256 = vpow.pop %v2255
        %v2257 = vmul.f32 %v2221, 1.442695
        %v2258 = vpow.pop %v2257
        %v2259 = vmul.f32 %v2222, 1.442695
        %v2260 = vpow.pop %v2259
        %v2261 = vmul.f32 %v2223, 1.442695
        %v2262 = vpow.pop %v2261
        %v2263 = vmul.f32 %v2224, 1.442695
        %v2264 = vpow.pop %v2263
        %v2265 = vmul.f32 %v2225, 1.442695
        %v2266 = vpow.pop %v2265
        %v2267 = vmul.f32 %v2226, 1.442695
        %v2268 = vpow.pop %v2267
        %v2269 = vmul.f32 %v2227, 1.442695
        %v2270 = vpow.pop %v2269
        %v2271 = vmul.f32 %v2228, 1.442695
        %v2272 = vpow.pop %v2271
        %v2273 = vmul.f32 %v2229, 1.442695
        %v2274 = vpow.pop %v2273
        %v2275 = vmul.f32 %v2230, 1.442695
        %v2276 = vpow.pop %v2275
        %v2277 = vmul.f32 %v2231, 1.442695
        %v2278 = vpow.pop %v2277
        %v2279 = vmul.f32 %v2232, 1.442695
        %v2280 = vpow.pop %v2279
        %v2281 = vmul.f32 %v2233, 1.442695
        %v2282 = vpow.pop %v2281
        %v2283 = vmul.f32 %v2234, 1.442695
        %v2284 = vpow.pop %v2283
        %v2285 = vmul.f32 %v2235, 1.442695
        %v2286 = vpow.pop %v2285
        %v2287 = vmul.f32 %v2236, 1.442695
        %v2288 = vpow.pop %v2287
        %v2289 = vmul.f32 %v2237, 1.442695
        %v2290 = vpow.pop %v2289
        %v2291 = vmul.f32 %v2238, 1.442695
        %v2292 = vpow.pop %v2291
        %v2293 = vmul.f32 %v2239, 1.442695
        %v2294 = vpow.pop %v2293
        %v2295 = vmul.f32 %v2240, 1.442695
        %v2296 = vpow.pop %v2295
        %v2297 = vmul.f32 %v2241, 1.442695
        %v2298 = vpow.pop %v2297
        %v2299 = vmul.f32 %v2242, 1.442695
        %v2300 = vpow.pop %v2299
        %v2301 = vmul.f32 %v2243, 1.442695
        %v2302 = vpow.pop %v2301
        %v2303 = vmul.f32 %v2244, 1.442695
        %v2304 = vpow.pop %v2303
        %v2305 = vmul.f32 %v2245, 1.442695
        %v2306 = vpow.pop %v2305
        %v2307 = vmul.f32 %v2246, 1.442695
        %v2308 = vpow.pop %v2307
        %v2309 = vmul.f32 %v2247, 1.442695
        %v2310 = vpow.pop %v2309
        %v2311 = vmul.f32 %v2248, 1.442695
        %v2312 = vpow.pop %v2311
        %2313 = vadd.xlane.f32.xlu0 %v2250
        %v2314 = vpop.xlane.xlu0 %2313
        %2315 = vadd.xlane.f32.xlu0 %v2252
        %v2316 = vpop.xlane.xlu0 %2315
        %2317 = vadd.xlane.f32.xlu0 %v2254
        %v2318 = vpop.xlane.xlu0 %2317
        %2319 = vadd.xlane.f32.xlu0 %v2256
        %v2320 = vpop.xlane.xlu0 %2319
        %2321 = vadd.xlane.f32.xlu0 %v2258
        %v2322 = vpop.xlane.xlu0 %2321
        %2323 = vadd.xlane.f32.xlu0 %v2260
        %v2324 = vpop.xlane.xlu0 %2323
        %2325 = vadd.xlane.f32.xlu0 %v2262
        %v2326 = vpop.xlane.xlu0 %2325
        %2327 = vadd.xlane.f32.xlu0 %v2264
        %v2328 = vpop.xlane.xlu0 %2327
        %2329 = vadd.xlane.f32.xlu0 %v2266
        %v2330 = vpop.xlane.xlu0 %2329
        %2331 = vadd.xlane.f32.xlu0 %v2268
        %v2332 = vpop.xlane.xlu0 %2331
        %2333 = vadd.xlane.f32.xlu0 %v2270
        %v2334 = vpop.xlane.xlu0 %2333
        %2335 = vadd.xlane.f32.xlu0 %v2272
        %v2336 = vpop.xlane.xlu0 %2335
        %2337 = vadd.xlane.f32.xlu0 %v2274
        %v2338 = vpop.xlane.xlu0 %2337
        %2339 = vadd.xlane.f32.xlu0 %v2276
        %v2340 = vpop.xlane.xlu0 %2339
        %2341 = vadd.xlane.f32.xlu0 %v2278
        %v2342 = vpop.xlane.xlu0 %2341
        %2343 = vadd.xlane.f32.xlu0 %v2280
        %v2344 = vpop.xlane.xlu0 %2343
        %2345 = vadd.xlane.f32.xlu0 %v2282
        %v2346 = vpop.xlane.xlu0 %2345
        %2347 = vadd.xlane.f32.xlu0 %v2284
        %v2348 = vpop.xlane.xlu0 %2347
        %2349 = vadd.xlane.f32.xlu0 %v2286
        %v2350 = vpop.xlane.xlu0 %2349
        %2351 = vadd.xlane.f32.xlu0 %v2288
        %v2352 = vpop.xlane.xlu0 %2351
        %2353 = vadd.xlane.f32.xlu0 %v2290
        %v2354 = vpop.xlane.xlu0 %2353
        %2355 = vadd.xlane.f32.xlu0 %v2292
        %v2356 = vpop.xlane.xlu0 %2355
        %2357 = vadd.xlane.f32.xlu0 %v2294
        %v2358 = vpop.xlane.xlu0 %2357
        %2359 = vadd.xlane.f32.xlu0 %v2296
        %v2360 = vpop.xlane.xlu0 %2359
        %2361 = vadd.xlane.f32.xlu0 %v2298
        %v2362 = vpop.xlane.xlu0 %2361
        %2363 = vadd.xlane.f32.xlu0 %v2300
        %v2364 = vpop.xlane.xlu0 %2363
        %2365 = vadd.xlane.f32.xlu0 %v2302
        %v2366 = vpop.xlane.xlu0 %2365
        %2367 = vadd.xlane.f32.xlu0 %v2304
        %v2368 = vpop.xlane.xlu0 %2367
        %2369 = vadd.xlane.f32.xlu0 %v2306
        %v2370 = vpop.xlane.xlu0 %2369
        %2371 = vadd.xlane.f32.xlu0 %v2308
        %v2372 = vpop.xlane.xlu0 %2371
        %2373 = vadd.xlane.f32.xlu0 %v2310
        %v2374 = vpop.xlane.xlu0 %2373
        %2375 = vadd.xlane.f32.xlu0 %v2312
        %v2376 = vpop.xlane.xlu0 %2375
        %v2377 = vlog2.pop %v2314
        %v2378 = vmul.f32 %v2377, 0.6931472
        %v2379 = vlog2.pop %v2316
        %v2380 = vmul.f32 %v2379, 0.6931472
        %v2381 = vlog2.pop %v2318
        %v2382 = vmul.f32 %v2381, 0.6931472
        %v2383 = vlog2.pop %v2320
        %v2384 = vmul.f32 %v2383, 0.6931472
        %v2385 = vlog2.pop %v2322
        %v2386 = vmul.f32 %v2385, 0.6931472
        %v2387 = vlog2.pop %v2324
        %v2388 = vmul.f32 %v2387, 0.6931472
        %v2389 = vlog2.pop %v2326
        %v2390 = vmul.f32 %v2389, 0.6931472
        %v2391 = vlog2.pop %v2328
        %v2392 = vmul.f32 %v2391, 0.6931472
        %v2393 = vlog2.pop %v2330
        %v2394 = vmul.f32 %v2393, 0.6931472
        %v2395 = vlog2.pop %v2332
        %v2396 = vmul.f32 %v2395, 0.6931472
        %v2397 = vlog2.pop %v2334
        %v2398 = vmul.f32 %v2397, 0.6931472
        %v2399 = vlog2.pop %v2336
        %v2400 = vmul.f32 %v2399, 0.6931472
        %v2401 = vlog2.pop %v2338
        %v2402 = vmul.f32 %v2401, 0.6931472
        %v2403 = vlog2.pop %v2340
        %v2404 = vmul.f32 %v2403, 0.6931472
        %v2405 = vlog2.pop %v2342
        %v2406 = vmul.f32 %v2405, 0.6931472
        %v2407 = vlog2.pop %v2344
        %v2408 = vmul.f32 %v2407, 0.6931472
        %v2409 = vlog2.pop %v2346
        %v2410 = vmul.f32 %v2409, 0.6931472
        %v2411 = vlog2.pop %v2348
        %v2412 = vmul.f32 %v2411, 0.6931472
        %v2413 = vlog2.pop %v2350
        %v2414 = vmul.f32 %v2413, 0.6931472
        %v2415 = vlog2.pop %v2352
        %v2416 = vmul.f32 %v2415, 0.6931472
        %v2417 = vlog2.pop %v2354
        %v2418 = vmul.f32 %v2417, 0.6931472
        %v2419 = vlog2.pop %v2356
        %v2420 = vmul.f32 %v2419, 0.6931472
        %v2421 = vlog2.pop %v2358
        %v2422 = vmul.f32 %v2421, 0.6931472
        %v2423 = vlog2.pop %v2360
        %v2424 = vmul.f32 %v2423, 0.6931472
        %v2425 = vlog2.pop %v2362
        %v2426 = vmul.f32 %v2425, 0.6931472
        %v2427 = vlog2.pop %v2364
        %v2428 = vmul.f32 %v2427, 0.6931472
        %v2429 = vlog2.pop %v2366
        %v2430 = vmul.f32 %v2429, 0.6931472
        %v2431 = vlog2.pop %v2368
        %v2432 = vmul.f32 %v2431, 0.6931472
        %v2433 = vlog2.pop %v2370
        %v2434 = vmul.f32 %v2433, 0.6931472
        %v2435 = vlog2.pop %v2372
        %v2436 = vmul.f32 %v2435, 0.6931472
        %v2437 = vlog2.pop %v2374
        %v2438 = vmul.f32 %v2437, 0.6931472
        %v2439 = vlog2.pop %v2376
        %v2440 = vmul.f32 %v2439, 0.6931472
        %v2441 = vsub.f32 %v2217, %v2378
        %v2442 = vsub.f32 %v2218, %v2380
        %v2443 = vsub.f32 %v2219, %v2382
        %v2444 = vsub.f32 %v2220, %v2384
        %v2445 = vsub.f32 %v2221, %v2386
        %v2446 = vsub.f32 %v2222, %v2388
        %v2447 = vsub.f32 %v2223, %v2390
        %v2448 = vsub.f32 %v2224, %v2392
        %v2449 = vsub.f32 %v2225, %v2394
        %v2450 = vsub.f32 %v2226, %v2396
        %v2451 = vsub.f32 %v2227, %v2398
        %v2452 = vsub.f32 %v2228, %v2400
        %v2453 = vsub.f32 %v2229, %v2402
        %v2454 = vsub.f32 %v2230, %v2404
        %v2455 = vsub.f32 %v2231, %v2406
        %v2456 = vsub.f32 %v2232, %v2408
        %v2457 = vsub.f32 %v2233, %v2410
        %v2458 = vsub.f32 %v2234, %v2412
        %v2459 = vsub.f32 %v2235, %v2414
        %v2460 = vsub.f32 %v2236, %v2416
        %v2461 = vsub.f32 %v2237, %v2418
        %v2462 = vsub.f32 %v2238, %v2420
        %v2463 = vsub.f32 %v2239, %v2422
        %v2464 = vsub.f32 %v2240, %v2424
        %v2465 = vsub.f32 %v2241, %v2426
        %v2466 = vsub.f32 %v2242, %v2428
        %v2467 = vsub.f32 %v2243, %v2430
        %v2468 = vsub.f32 %v2244, %v2432
        %v2469 = vsub.f32 %v2245, %v2434
        %v2470 = vsub.f32 %v2246, %v2436
        %v2471 = vsub.f32 %v2247, %v2438
        %v2472 = vsub.f32 %v2248, %v2440
        %v2473 = vpack.c.bf16 %v2442, %v2441
        %v2474 = vpack.c.bf16 %v2444, %v2443
        %v2475 = vpack.c.bf16 %v2446, %v2445
        %v2476 = vpack.c.bf16 %v2448, %v2447
        %v2477 = vpack.c.bf16 %v2450, %v2449
        %v2478 = vpack.c.bf16 %v2452, %v2451
        %v2479 = vpack.c.bf16 %v2454, %v2453
        %v2480 = vpack.c.bf16 %v2456, %v2455
        %v2481 = vpack.c.bf16 %v2458, %v2457
        %v2482 = vpack.c.bf16 %v2460, %v2459
        %v2483 = vpack.c.bf16 %v2462, %v2461
        %v2484 = vpack.c.bf16 %v2464, %v2463
        %v2485 = vpack.c.bf16 %v2466, %v2465
        %v2486 = vpack.c.bf16 %v2468, %v2467
        %v2487 = vpack.c.bf16 %v2470, %v2469
        %v2488 = vpack.c.bf16 %v2472, %v2471
        %v2505 = vunpack.c.l.b16 %v2473
        %v2506 = vunpack.c.h.b16 %v2473
        %v2507 = vunpack.c.l.b16 %v2474
        %v2508 = vunpack.c.h.b16 %v2474
        %v2509 = vunpack.c.l.b16 %v2475
        %v2510 = vunpack.c.h.b16 %v2475
        %v2511 = vunpack.c.l.b16 %v2476
        %v2512 = vunpack.c.h.b16 %v2476
        %v2513 = vunpack.c.l.b16 %v2477
        %v2514 = vunpack.c.h.b16 %v2477
        %v2515 = vunpack.c.l.b16 %v2478
        %v2516 = vunpack.c.h.b16 %v2478
        %v2517 = vunpack.c.l.b16 %v2479
        %v2518 = vunpack.c.h.b16 %v2479
        %v2519 = vunpack.c.l.b16 %v2480
        %v2520 = vunpack.c.h.b16 %v2480
        %v2521 = vunpack.c.l.b16 %v2481
        %v2522 = vunpack.c.h.b16 %v2481
        %v2523 = vunpack.c.l.b16 %v2482
        %v2524 = vunpack.c.h.b16 %v2482
        %v2525 = vunpack.c.l.b16 %v2483
        %v2526 = vunpack.c.h.b16 %v2483
        %v2527 = vunpack.c.l.b16 %v2484
        %v2528 = vunpack.c.h.b16 %v2484
        %v2529 = vunpack.c.l.b16 %v2485
        %v2530 = vunpack.c.h.b16 %v2485
        %v2531 = vunpack.c.l.b16 %v2486
        %v2532 = vunpack.c.h.b16 %v2486
        %v2533 = vunpack.c.l.b16 %v2487
        %v2534 = vunpack.c.h.b16 %v2487
        %v2535 = vunpack.c.l.b16 %v2488
        %v2536 = vunpack.c.h.b16 %v2488
        %v2537 = vpack.c.b16 %v2505, %v2505
        %v2538 = vpack.c.b16 %v2506, %v2506
        %v2539 = vpack.c.b16 %v2507, %v2507
        %v2540 = vpack.c.b16 %v2508, %v2508
        %v2541 = vpack.c.b16 %v2509, %v2509
        %v2542 = vpack.c.b16 %v2510, %v2510
        %v2543 = vpack.c.b16 %v2511, %v2511
        %v2544 = vpack.c.b16 %v2512, %v2512
        %v2545 = vpack.c.b16 %v2513, %v2513
        %v2546 = vpack.c.b16 %v2514, %v2514
        %v2547 = vpack.c.b16 %v2515, %v2515
        %v2548 = vpack.c.b16 %v2516, %v2516
        %v2549 = vpack.c.b16 %v2517, %v2517
        %v2550 = vpack.c.b16 %v2518, %v2518
        %v2551 = vpack.c.b16 %v2519, %v2519
        %v2552 = vpack.c.b16 %v2520, %v2520
        %v2553 = vpack.c.b16 %v2521, %v2521
        %v2554 = vpack.c.b16 %v2522, %v2522
        %v2555 = vpack.c.b16 %v2523, %v2523
        %v2556 = vpack.c.b16 %v2524, %v2524
        %v2557 = vpack.c.b16 %v2525, %v2525
        %v2558 = vpack.c.b16 %v2526, %v2526
        %v2559 = vpack.c.b16 %v2527, %v2527
        %v2560 = vpack.c.b16 %v2528, %v2528
        %v2561 = vpack.c.b16 %v2529, %v2529
        %v2562 = vpack.c.b16 %v2530, %v2530
        %v2563 = vpack.c.b16 %v2531, %v2531
        %v2564 = vpack.c.b16 %v2532, %v2532
        %v2565 = vpack.c.b16 %v2533, %v2533
        %v2566 = vpack.c.b16 %v2534, %v2534
        %v2567 = vpack.c.b16 %v2535, %v2535
        %v2568 = vpack.c.b16 %v2536, %v2536
        %2601 = vst [vmem:[%s304] sm:$0xf] %v2537
        %2602 = vst [vmem:[%s304 + $0x4] sm:$0xf] %v2538
        %2603 = vst [vmem:[%s304 + $0x8] sm:$0xf] %v2539
        %2604 = vst [vmem:[%s304 + $0xc] sm:$0xf] %v2540
        %2605 = vst [vmem:[%s304 + $0x10] sm:$0xf] %v2541
        %2606 = vst [vmem:[%s304 + $0x14] sm:$0xf] %v2542
        %2607 = vst [vmem:[%s304 + $0x18] sm:$0xf] %v2543
        %2608 = vst [vmem:[%s304 + $0x1c] sm:$0xf] %v2544
        %2609 = vst [vmem:[%s304 + $0x20] sm:$0xf] %v2545
        %2610 = vst [vmem:[%s304 + $0x24] sm:$0xf] %v2546
        %2611 = vst [vmem:[%s304 + $0x28] sm:$0xf] %v2547
        %2612 = vst [vmem:[%s304 + $0x2c] sm:$0xf] %v2548
        %2613 = vst [vmem:[%s304 + $0x30] sm:$0xf] %v2549
        %2614 = vst [vmem:[%s304 + $0x34] sm:$0xf] %v2550
        %2615 = vst [vmem:[%s304 + $0x38] sm:$0xf] %v2551
        %2616 = vst [vmem:[%s304 + $0x3c] sm:$0xf] %v2552
        %2617 = vst [vmem:[%s304 + $0x40] sm:$0xf] %v2553
        %2618 = vst [vmem:[%s304 + $0x44] sm:$0xf] %v2554
        %2619 = vst [vmem:[%s304 + $0x48] sm:$0xf] %v2555
        %2620 = vst [vmem:[%s304 + $0x4c] sm:$0xf] %v2556
        %2621 = vst [vmem:[%s304 + $0x50] sm:$0xf] %v2557
        %2622 = vst [vmem:[%s304 + $0x54] sm:$0xf] %v2558
        %2623 = vst [vmem:[%s304 + $0x58] sm:$0xf] %v2559
        %2624 = vst [vmem:[%s304 + $0x5c] sm:$0xf] %v2560
        %2625 = vst [vmem:[%s304 + $0x60] sm:$0xf] %v2561
        %2626 = vst [vmem:[%s304 + $0x64] sm:$0xf] %v2562
        %2627 = vst [vmem:[%s304 + $0x68] sm:$0xf] %v2563
        %2628 = vst [vmem:[%s304 + $0x6c] sm:$0xf] %v2564
        %2629 = vst [vmem:[%s304 + $0x70] sm:$0xf] %v2565
        %2630 = vst [vmem:[%s304 + $0x74] sm:$0xf] %v2566
        %2631 = vst [vmem:[%s304 + $0x78] sm:$0xf] %v2567
        %2632 = vst [vmem:[%s304 + $0x7c] sm:$0xf] %v2568
        %s2633 = sand.u32 %s142, 1
        %s2634 = scalar_lea.sflag [#allocation4], %s2633
        %s2635 = sand.u32 %s142, 1
        %s2636 = smul.addr %s2635, 128
        %s2637 = scalar_lea.vmem [#allocation11], %s2636
        // Predicated region
        $region61: #{tpu_custom_call.1} parent=39 // pred_check
          %p2638 = pneg %p152
        $region62: #{tpu_custom_call.1} parent=39 // pred_check_branch
          %2640 = sbr.rel (%p2638) target = $region64
        $region63: #{tpu_custom_call.1} parent=39 // pred_region
          %s2641 = smul.u32 32, %s24
          %s2642 = ssub.s32 38, %s2641
          %p2643 = scmp.lt.s32.totalorder %s2642, 32
          %s2644 = scalar_select %p2643, %s2642, 32
          %s2645 = smul.u32 64, %s2644
          %s2647 = ssub.s32 2048, %s2645
          %2648 = vsyncadd %s2634, %s2647
          %p2649 = scmp.ne.s32.totalorder 0, %s2645
          %s2650 = smul.addr %s2641, 64
          %s2651 = scalar_lea.hbm %s5, %s2650
          %s2652 = smul.u32 4, %s2644
          %s2653 = sshll.u32 %s2637, 4
          %s2654 = int_to_ptr.vmem [resolvable:$true] %s2653
          %s2655 = sshll.u32 %s2652, 4
          %2659 = dma.vmem_to_hbm [thread:$0]  (%p2649), %s2654, %s2655, %s2651, %s2634, 64, 64, 4
        $region64: #{tpu_custom_call.1} parent=39 // pred_fallthru
          _
      $region40: #{tpu_custom_call.1} parent=5 // pred_fallthru
        _
      %p2660 = scmp.le.s32.totalorder 2, %s19
      // Predicated region
      $region65: #{tpu_custom_call.1} parent=5 // pred_check
        %p2661 = pneg %p2660
      $region66: #{tpu_custom_call.1} parent=5 // pred_check_branch
        %2663 = sbr.rel (%p2661) target = $region68
      $region67: #{tpu_custom_call.1} parent=5 // pred_region
        %s2664 = ssub.s32 %s19, 2
        // Predicated region
        $region69: #{tpu_custom_call.1} parent=67 // pred_check
          %p2665 = pneg %p158
        $region70: #{tpu_custom_call.1} parent=67 // pred_check_branch
          %2667 = sbr.rel (%p2665) target = $region72
        $region71: #{tpu_custom_call.1} parent=67 // pred_region
          %s2668 = sand.u32 %s143, 1
          %s2669 = scalar_lea.sflag [#allocation4], %s2668
          %s2670 = sand.u32 %s143, 1
          %s2671 = smul.addr %s2670, 128
          %s2672 = scalar_lea.vmem [#allocation11], %s2671
          %2673 = dma.done %s2669, 2048
        $region72: #{tpu_custom_call.1} parent=67 // pred_fallthru
          _
      $region68: #{tpu_custom_call.1} parent=5 // pred_fallthru
        _
    $region6: #{tpu_custom_call.1} parent=1 // loop_footer
      %s23 = sadd.s32 1, %s19
    $region7: #{tpu_custom_call.1} parent=1 // loop_footer_branch
      %18 = sbr.rel target = $region3
    $region8: #{tpu_custom_call.1} parent=1 // loop_exit
      _
    %2674 = vsyncpa [#allocation3], 1
    %s2675 = scalar_lea.sflag [#allocation3], 1
    %2676 = vsyncpa %s2675, 1
    %2677 = vsyncpa [#allocation6], 1
    %2678 = vsyncpa [#allocation9], 1
    %2679 = vsyncpa [#allocation4], 1
    %s2680 = scalar_lea.sflag [#allocation4], 1
    %2681 = vsyncpa %s2680, 1

</llo_original>
